<compile_context>
chip_gen: v5e
topology: v5e:2x2
jax: 0.10.0
libtpu: 0.0.40
codegen_flags: <defaults>
</compile_context>

<pallas_src>
import jax
import jax.numpy as jnp
import numpy as np
from jax.experimental import pallas as pl
from jax.experimental.pallas import tpu as pltpu

# Small, module-consistent sizes (embedding_dim divisible by num_heads).
BATCH = 2
SEQ = 8
EMBED = 128                 # lane-dense last dim (real ViT default is 768 / 12 heads)
HEADS = 4
HEAD_DIM = EMBED // HEADS
LN_EPS = 1e-5

# bf16 operands for the MXU (f32 accumulation). Set to jnp.float32 for bit-tight checks.
MXU_DTYPE = jnp.bfloat16


def mhsa_block_kernel(x_ref, gamma_ref, beta_ref, wqkv_ref, bqkv_ref,
                      wout_ref, bout_ref, o_ref):
    # Single grid step: x_ref holds the whole batch flattened to (B*S, E).
    x = x_ref[...]                                              # (B*S, E) f32

    # ---- LayerNorm over the embedding dim (f32 statistics) ----
    mean = jnp.mean(x, axis=-1, keepdims=True)
    var = jnp.mean((x - mean) ** 2, axis=-1, keepdims=True)
    ln = (x - mean) * jax.lax.rsqrt(var + LN_EPS)
    ln = ln * gamma_ref[...] + beta_ref[...]                    # (B*S, E)

    # ---- fused QKV projection over all B*S rows (bf16 operands, f32 accumulate) ----
    # Weight is pre-transposed and the q-side 1/sqrt(head_dim) is pre-folded.
    qkv = jnp.dot(ln.astype(MXU_DTYPE), wqkv_ref[...],
                  preferred_element_type=jnp.float32) + bqkv_ref[...]   # (B*S, 3E) f32

    # ---- split heads: 128-lane-aligned slices at 0 / E / 2E ----
    def split_heads(t):                                         # (B*S, E) -> (B*H, S, Dh)
        return (t.reshape(BATCH, SEQ, HEADS, HEAD_DIM)
                 .transpose(0, 2, 1, 3)
                 .reshape(BATCH * HEADS, SEQ, HEAD_DIM))

    q = split_heads(qkv[:, :EMBED])            # q-scale already folded into W_q / b_q
    k = split_heads(qkv[:, EMBED:2 * EMBED])
    v = split_heads(qkv[:, 2 * EMBED:])

    # ---- one batched attention pass over all (batch, head) pairs ----
    s = jnp.einsum('bqd,bkd->bqk', q, k,
                   preferred_element_type=jnp.float32)          # (B*H, S, S) f32
    m = jnp.max(s, axis=-1, keepdims=True)
    p = jnp.exp(s - m)
    p = p / jnp.sum(p, axis=-1, keepdims=True)                  # exact divide (correctness fix)

    ctx = jnp.einsum('bqk,bkd->bqd', p.astype(MXU_DTYPE), v.astype(MXU_DTYPE),
                     preferred_element_type=jnp.float32)        # (B*H, S, Dh) f32
    # merge heads back to (B*S, E); stays register-resident (no VMEM scratch)
    ctx = (ctx.reshape(BATCH, HEADS, SEQ, HEAD_DIM)
              .transpose(0, 2, 1, 3)
              .reshape(BATCH * SEQ, EMBED))

    # ---- output projection + residual ----
    out = jnp.dot(ctx.astype(MXU_DTYPE), wout_ref[...],
                  preferred_element_type=jnp.float32) + bout_ref[...]
    o_ref[...] = (out + x).astype(o_ref.dtype)


def mhsa_block(x, gamma, beta, in_w, in_b, out_w, out_b):
    """x: (B, S, E). Weights use PyTorch conventions: in_w (3E, E), out_w (E, E)."""
    B, S, E = x.shape
    scale = 1.0 / float(HEAD_DIM) ** 0.5

    # Host/trace-time prep: transpose weights, fold q-scale into W_q / b_q, cast weights
    # to bf16 for the MXU (biases stay f32; they are added to the f32 accumulator).
    scale_vec = jnp.concatenate(
        [jnp.full((E,), scale, jnp.float32), jnp.ones((2 * E,), jnp.float32)])
    wqkv_t = (in_w.T * scale_vec[None, :]).astype(MXU_DTYPE)    # (E, 3E)
    bqkv = (in_b * scale_vec[None, :]).astype(jnp.float32)      # (1, 3E)
    wout_t = out_w.T.astype(MXU_DTYPE)                          # (E, E)

    x2 = x.reshape(B * S, E)                                    # lane-dense rows

    out2 = pl.pallas_call(
        mhsa_block_kernel,
        out_shape=jax.ShapeDtypeStruct((B * S, E), x.dtype),
        grid_spec=pltpu.PrefetchScalarGridSpec(
            num_scalar_prefetch=0,
            grid=(1,),                      # whole (tiny) problem in one step / one VMEM tile
            in_specs=[
                pl.BlockSpec((B * S, E), lambda i: (0, 0)),     # x (flattened)
                pl.BlockSpec((1, E), lambda i: (0, 0)),         # ln gamma
                pl.BlockSpec((1, E), lambda i: (0, 0)),         # ln beta
                pl.BlockSpec((E, 3 * E), lambda i: (0, 0)),     # qkv weight (pre-T, q-scaled, bf16)
                pl.BlockSpec((1, 3 * E), lambda i: (0, 0)),     # qkv bias (q-scaled, f32)
                pl.BlockSpec((E, E), lambda i: (0, 0)),         # out weight (pre-T, bf16)
                pl.BlockSpec((1, E), lambda i: (0, 0)),         # out bias (f32)
            ],
            out_specs=pl.BlockSpec((B * S, E), lambda i: (0, 0)),
        ),
        compiler_params=pltpu.CompilerParams(
            dimension_semantics=("arbitrary",)),
    )(x2, gamma, beta, wqkv_t, bqkv, wout_t, out_b)
    return out2.reshape(B, S, E)


def reference(x, gamma, beta, in_w, in_b, out_w, out_b):
    # Pure-JAX f32 reference mirroring nn.LayerNorm + nn.MultiheadAttention forward
    # (uses the ORIGINAL PyTorch-convention weights; no folding, no bf16).
    B, S, E = x.shape
    mean = x.mean(-1, keepdims=True)
    var = ((x - mean) ** 2).mean(-1, keepdims=True)
    ln = (x - mean) / jnp.sqrt(var + LN_EPS) * gamma + beta
    qkv = jnp.einsum('bse,fe->bsf', ln, in_w) + in_b
    q, k, v = jnp.split(qkv, 3, axis=-1)

    def split_heads(t):
        return t.reshape(B, S, HEADS, HEAD_DIM).transpose(0, 2, 1, 3)

    qh, kh, vh = map(split_heads, (q, k, v))
    s = jnp.einsum('bhqd,bhkd->bhqk', qh, kh) / jnp.sqrt(float(HEAD_DIM))
    p = jax.nn.softmax(s, axis=-1)
    o = jnp.einsum('bhqk,bhkd->bhqd', p, vh)
    o = o.transpose(0, 2, 1, 3).reshape(B, S, E)
    return jnp.einsum('bse,fe->bsf', o, out_w) + out_b + x


if __name__ == "__main__":
    key = jax.random.PRNGKey(0)
    kx, kg, kb, kiw, kib, kow, kob = jax.random.split(key, 7)

    x = jax.random.normal(kx, (BATCH, SEQ, EMBED), dtype=jnp.float32)
    gamma = 1.0 + 0.1 * jax.random.normal(kg, (1, EMBED), dtype=jnp.float32)
    beta = 0.1 * jax.random.normal(kb, (1, EMBED), dtype=jnp.float32)
    in_w = 0.1 * jax.random.normal(kiw, (3 * EMBED, EMBED), dtype=jnp.float32)
    in_b = 0.1 * jax.random.normal(kib, (1, 3 * EMBED), dtype=jnp.float32)
    out_w = 0.1 * jax.random.normal(kow, (EMBED, EMBED), dtype=jnp.float32)
    out_b = 0.1 * jax.random.normal(kob, (1, EMBED), dtype=jnp.float32)

    out = mhsa_block(x, gamma, beta, in_w, in_b, out_w, out_b)
    out = jax.block_until_ready(out)

    ref = reference(x, gamma, beta, in_w, in_b, out_w, out_b)
    # Softmax uses an exact divide now; remaining deviation vs. the f32 reference comes
    # only from bf16 MXU operand rounding (~2^-9 relative per operand, accumulated over
    # the two projections and the p@V einsum).
    tol = 3e-2 if MXU_DTYPE == jnp.bfloat16 else 2e-3
    np.testing.assert_allclose(np.asarray(out), np.asarray(ref), rtol=tol, atol=tol)
    print("KERNEL_OK")
</pallas_src>

<mosaic_0001>
module attributes {stable_mosaic.version = 11 : i64} {
  func.func @mhsa_block_kernel(%arg0: i32, %arg1: memref<16x128xf32, #tpu.memory_space<vmem>>, %arg2: memref<1x128xf32, #tpu.memory_space<vmem>>, %arg3: memref<1x128xf32, #tpu.memory_space<vmem>>, %arg4: memref<128x384xbf16, #tpu.memory_space<vmem>>, %arg5: memref<1x384xf32, #tpu.memory_space<vmem>>, %arg6: memref<128x128xbf16, #tpu.memory_space<vmem>>, %arg7: memref<1x128xf32, #tpu.memory_space<vmem>>, %arg8: memref<16x128xf32, #tpu.memory_space<vmem>>) attributes {dimension_semantics = [#tpu.dimension_semantics<arbitrary>], iteration_bounds = array<i64: 1>, scalar_prefetch = 0 : i64, scratch_operands = 0 : i64, tpu.core_type = #tpu.core_type<tc>, window_params = [{pipeline_mode = #tpu.pipeline_mode<synchronous>, transform_indices = @transform_0, window_bounds = array<i64: 16, 128>}, {pipeline_mode = #tpu.pipeline_mode<synchronous>, transform_indices = @transform_1, window_bounds = array<i64: 1, 128>}, {pipeline_mode = #tpu.pipeline_mode<synchronous>, transform_indices = @transform_2, window_bounds = array<i64: 1, 128>}, {pipeline_mode = #tpu.pipeline_mode<synchronous>, transform_indices = @transform_3, window_bounds = array<i64: 128, 384>}, {pipeline_mode = #tpu.pipeline_mode<synchronous>, transform_indices = @transform_4, window_bounds = array<i64: 1, 384>}, {pipeline_mode = #tpu.pipeline_mode<synchronous>, transform_indices = @transform_5, window_bounds = array<i64: 128, 128>}, {pipeline_mode = #tpu.pipeline_mode<synchronous>, transform_indices = @transform_6, window_bounds = array<i64: 1, 128>}, {pipeline_mode = #tpu.pipeline_mode<synchronous>, transform_indices = @transform_7, window_bounds = array<i64: 16, 128>}]} {
    %c0 = arith.constant 0 : index
    %c0_0 = arith.constant 0 : index
    %0 = vector.load %arg1[%c0, %c0_0] : memref<16x128xf32, #tpu.memory_space<vmem>>, vector<16x128xf32>
    %cst = arith.constant dense<0.000000e+00> : vector<16xf32>
    %1 = vector.multi_reduction <add>, %0, %cst [1] : vector<16x128xf32> to vector<16xf32>
    %2 = vector.shape_cast %1 : vector<16xf32> to vector<16x1xf32>
    %cst_1 = arith.constant 1.280000e+02 : f32
    %3 = vector.broadcast %cst_1 : f32 to vector<16x1xf32>
    %4 = arith.divf %2, %3 : vector<16x1xf32>
    %5 = vector.broadcast %4 : vector<16x1xf32> to vector<16x128xf32>
    %6 = arith.subf %0, %5 : vector<16x128xf32>
    %7 = arith.mulf %6, %6 : vector<16x128xf32>
    %cst_2 = arith.constant dense<0.000000e+00> : vector<16xf32>
    %8 = vector.multi_reduction <add>, %7, %cst_2 [1] : vector<16x128xf32> to vector<16xf32>
    %9 = vector.shape_cast %8 : vector<16xf32> to vector<16x1xf32>
    %cst_3 = arith.constant 1.280000e+02 : f32
    %10 = vector.broadcast %cst_3 : f32 to vector<16x1xf32>
    %11 = arith.divf %9, %10 : vector<16x1xf32>
    %12 = vector.broadcast %4 : vector<16x1xf32> to vector<16x128xf32>
    %13 = arith.subf %0, %12 : vector<16x128xf32>
    %cst_4 = arith.constant 9.99999974E-6 : f32
    %14 = vector.broadcast %cst_4 : f32 to vector<16x1xf32>
    %15 = arith.addf %11, %14 : vector<16x1xf32>
    %16 = math.rsqrt %15 : vector<16x1xf32>
    %17 = vector.broadcast %16 : vector<16x1xf32> to vector<16x128xf32>
    %18 = arith.mulf %13, %17 : vector<16x128xf32>
    %c0_5 = arith.constant 0 : index
    %c0_6 = arith.constant 0 : index
    %19 = vector.load %arg2[%c0_5, %c0_6] : memref<1x128xf32, #tpu.memory_space<vmem>>, vector<1x128xf32>
    %20 = vector.broadcast %19 : vector<1x128xf32> to vector<16x128xf32>
    %21 = arith.mulf %18, %20 : vector<16x128xf32>
    %c0_7 = arith.constant 0 : index
    %c0_8 = arith.constant 0 : index
    %22 = vector.load %arg3[%c0_7, %c0_8] : memref<1x128xf32, #tpu.memory_space<vmem>>, vector<1x128xf32>
    %23 = vector.broadcast %22 : vector<1x128xf32> to vector<16x128xf32>
    %24 = arith.addf %21, %23 : vector<16x128xf32>
    %25 = arith.truncf %24 : vector<16x128xf32> to vector<16x128xbf16>
    %c0_9 = arith.constant 0 : index
    %c0_10 = arith.constant 0 : index
    %26 = vector.load %arg4[%c0_9, %c0_10] : memref<128x384xbf16, #tpu.memory_space<vmem>>, vector<128x384xbf16>
    %cst_11 = arith.constant dense<0.000000e+00> : vector<16x384xf32>
    %27 = tpu.matmul %25, %26, %cst_11 {dimension_numbers = #tpu.dot_dimension_numbers<[1], [0], [0], [1], [0, 0, 1, 1], [], []>} : vector<16x128xbf16>, vector<128x384xbf16>, vector<16x384xf32> -> vector<16x384xf32>
    %c0_12 = arith.constant 0 : index
    %c0_13 = arith.constant 0 : index
    %28 = vector.load %arg5[%c0_12, %c0_13] : memref<1x384xf32, #tpu.memory_space<vmem>>, vector<1x384xf32>
    %29 = vector.broadcast %28 : vector<1x384xf32> to vector<16x384xf32>
    %30 = arith.addf %27, %29 : vector<16x384xf32>
    %31 = vector.extract_strided_slice %30 {offsets = [0, 0], sizes = [16, 128], strides = [1, 1]} : vector<16x384xf32> to vector<16x128xf32>
    %32 = vector.shape_cast %31 : vector<16x128xf32> to vector<2x8x4x32xf32>
    %33 = tpu.transpose %32, [0, 2, 1, 3] : vector<2x8x4x32xf32> -> vector<2x4x8x32xf32>
    %34 = vector.shape_cast %33 : vector<2x4x8x32xf32> to vector<8x8x32xf32>
    %35 = vector.extract_strided_slice %30 {offsets = [0, 128], sizes = [16, 128], strides = [1, 1]} : vector<16x384xf32> to vector<16x128xf32>
    %36 = vector.shape_cast %35 : vector<16x128xf32> to vector<2x8x4x32xf32>
    %37 = tpu.transpose %36, [0, 2, 1, 3] : vector<2x8x4x32xf32> -> vector<2x4x8x32xf32>
    %38 = vector.shape_cast %37 : vector<2x4x8x32xf32> to vector<8x8x32xf32>
    %39 = vector.extract_strided_slice %30 {offsets = [0, 256], sizes = [16, 128], strides = [1, 1]} : vector<16x384xf32> to vector<16x128xf32>
    %40 = vector.shape_cast %39 : vector<16x128xf32> to vector<2x8x4x32xf32>
    %41 = tpu.transpose %40, [0, 2, 1, 3] : vector<2x8x4x32xf32> -> vector<2x4x8x32xf32>
    %42 = vector.shape_cast %41 : vector<2x4x8x32xf32> to vector<8x8x32xf32>
    "tpu.trace_start"() <{level = 10 : i32, message = "bqd,bkd->bqk"}> : () -> ()
    %cst_14 = arith.constant dense<0.000000e+00> : vector<8x8x8xf32>
    %43 = tpu.matmul %34, %38, %cst_14 {dimension_numbers = #tpu.dot_dimension_numbers<[2], [2], [1], [1], [0, 0, 0, 1, 1, 1], [0], [0]>} : vector<8x8x32xf32>, vector<8x8x32xf32>, vector<8x8x8xf32> -> vector<8x8x8xf32>
    "tpu.trace_stop"() : () -> ()
    %cst_15 = arith.constant dense<0xFF800000> : vector<8x8xf32>
    %44 = vector.multi_reduction <maximumf>, %43, %cst_15 [2] : vector<8x8x8xf32> to vector<8x8xf32>
    %45 = vector.shape_cast %44 : vector<8x8xf32> to vector<8x8x1xf32>
    %46 = vector.broadcast %45 : vector<8x8x1xf32> to vector<8x8x8xf32>
    %47 = arith.subf %43, %46 : vector<8x8x8xf32>
    %48 = math.exp %47 : vector<8x8x8xf32>
    %cst_16 = arith.constant dense<0.000000e+00> : vector<8x8xf32>
    %49 = vector.multi_reduction <add>, %48, %cst_16 [2] : vector<8x8x8xf32> to vector<8x8xf32>
    %50 = vector.shape_cast %49 : vector<8x8xf32> to vector<8x8x1xf32>
    %51 = vector.broadcast %50 : vector<8x8x1xf32> to vector<8x8x8xf32>
    %52 = arith.divf %48, %51 : vector<8x8x8xf32>
    %53 = arith.truncf %52 : vector<8x8x8xf32> to vector<8x8x8xbf16>
    %54 = arith.truncf %42 : vector<8x8x32xf32> to vector<8x8x32xbf16>
    "tpu.trace_start"() <{level = 10 : i32, message = "bqk,bkd->bqd"}> : () -> ()
    %cst_17 = arith.constant dense<0.000000e+00> : vector<8x8x32xf32>
    %55 = tpu.matmul %53, %54, %cst_17 {dimension_numbers = #tpu.dot_dimension_numbers<[2], [1], [1], [2], [0, 0, 0, 1, 1, 2], [0], [0]>} : vector<8x8x8xbf16>, vector<8x8x32xbf16>, vector<8x8x32xf32> -> vector<8x8x32xf32>
    "tpu.trace_stop"() : () -> ()
    %56 = vector.shape_cast %55 : vector<8x8x32xf32> to vector<2x4x8x32xf32>
    %57 = tpu.transpose %56, [0, 2, 1, 3] : vector<2x4x8x32xf32> -> vector<2x8x4x32xf32>
    %58 = vector.shape_cast %57 : vector<2x8x4x32xf32> to vector<16x128xf32>
    %59 = arith.truncf %58 : vector<16x128xf32> to vector<16x128xbf16>
    %c0_18 = arith.constant 0 : index
    %c0_19 = arith.constant 0 : index
    %60 = vector.load %arg6[%c0_18, %c0_19] : memref<128x128xbf16, #tpu.memory_space<vmem>>, vector<128x128xbf16>
    %cst_20 = arith.constant dense<0.000000e+00> : vector<16x128xf32>
    %61 = tpu.matmul %59, %60, %cst_20 {dimension_numbers = #tpu.dot_dimension_numbers<[1], [0], [0], [1], [0, 0, 1, 1], [], []>} : vector<16x128xbf16>, vector<128x128xbf16>, vector<16x128xf32> -> vector<16x128xf32>
    %c0_21 = arith.constant 0 : index
    %c0_22 = arith.constant 0 : index
    %62 = vector.load %arg7[%c0_21, %c0_22] : memref<1x128xf32, #tpu.memory_space<vmem>>, vector<1x128xf32>
    %63 = vector.broadcast %62 : vector<1x128xf32> to vector<16x128xf32>
    %64 = arith.addf %61, %63 : vector<16x128xf32>
    %65 = arith.addf %64, %0 : vector<16x128xf32>
    %c0_23 = arith.constant 0 : index
    %c0_24 = arith.constant 0 : index
    %66 = vector.load %arg8[%c0_23, %c0_24] : memref<16x128xf32, #tpu.memory_space<vmem>>, vector<16x128xf32>
    tpu.vector_store %arg8[%c0_23, %c0_24], %65 {strides = array<i32>} : memref<16x128xf32, #tpu.memory_space<vmem>>, vector<16x128xf32>,
    return
  }
  func.func @transform_0(%arg0: i32) -> (i32, i32) {
    %c0_i32 = arith.constant 0 : i32
    %c0_i32_0 = arith.constant 0 : i32
    %c0_i32_1 = arith.constant 0 : i32
    return %c0_i32, %c0_i32_0 : i32, i32
  }
  func.func @transform_1(%arg0: i32) -> (i32, i32) {
    %c0_i32 = arith.constant 0 : i32
    %c0_i32_0 = arith.constant 0 : i32
    %c0_i32_1 = arith.constant 0 : i32
    return %c0_i32, %c0_i32_0 : i32, i32
  }
  func.func @transform_2(%arg0: i32) -> (i32, i32) {
    %c0_i32 = arith.constant 0 : i32
    %c0_i32_0 = arith.constant 0 : i32
    %c0_i32_1 = arith.constant 0 : i32
    return %c0_i32, %c0_i32_0 : i32, i32
  }
  func.func @transform_3(%arg0: i32) -> (i32, i32) {
    %c0_i32 = arith.constant 0 : i32
    %c0_i32_0 = arith.constant 0 : i32
    %c0_i32_1 = arith.constant 0 : i32
    return %c0_i32, %c0_i32_0 : i32, i32
  }
  func.func @transform_4(%arg0: i32) -> (i32, i32) {
    %c0_i32 = arith.constant 0 : i32
    %c0_i32_0 = arith.constant 0 : i32
    %c0_i32_1 = arith.constant 0 : i32
    return %c0_i32, %c0_i32_0 : i32, i32
  }
  func.func @transform_5(%arg0: i32) -> (i32, i32) {
    %c0_i32 = arith.constant 0 : i32
    %c0_i32_0 = arith.constant 0 : i32
    %c0_i32_1 = arith.constant 0 : i32
    return %c0_i32, %c0_i32_0 : i32, i32
  }
  func.func @transform_6(%arg0: i32) -> (i32, i32) {
    %c0_i32 = arith.constant 0 : i32
    %c0_i32_0 = arith.constant 0 : i32
    %c0_i32_1 = arith.constant 0 : i32
    return %c0_i32, %c0_i32_0 : i32, i32
  }
  func.func @transform_7(%arg0: i32) -> (i32, i32) {
    %c0_i32 = arith.constant 0 : i32
    %c0_i32_0 = arith.constant 0 : i32
    %c0_i32_1 = arith.constant 0 : i32
    return %c0_i32, %c0_i32_0 : i32, i32
  }
}

</mosaic_0001>

<llo_original>
// kernel: tpu_custom_call.1
$region0: #{tpu_custom_call.1}
  #allocation0 [shape = 'u32[]', space=smem, size = 0x4, offset = 0x4, fixed_abs, tag = 'smem constant byte address 0x4 - core index']
  #allocation1 [shape = 'u32[72,128]{1,0:T(1,128)}', space=vmem, size = 0x9000, scoped, tag = 'internal scratch']
  %s0 = inlined_call_operand.hbm [shape: f32[16,128], index: 0, kind: input, shape index: {}]
  %s1 = inlined_call_operand.hbm [shape: f32[1,128], index: 1, kind: input, shape index: {}]
  %s2 = inlined_call_operand.hbm [shape: f32[1,128], index: 2, kind: input, shape index: {}]
  %s3 = inlined_call_operand.hbm [shape: bf16[128,384], index: 3, kind: input, shape index: {}]
  %s4 = inlined_call_operand.vmem [shape: f32[1,384], index: 4, kind: input, shape index: {}]
  %s5 = inlined_call_operand.hbm [shape: bf16[128,128], index: 5, kind: input, shape index: {}]
  %s6 = inlined_call_operand.vmem [shape: f32[1,128], index: 6, kind: input, shape index: {}]
  %s7 = inlined_call_operand.hbm [shape: f32[16,128], index: 7, kind: output, shape index: {}]
  %s8 = sld [smem:[#allocation0]]
  $region58: #{tpu_custom_call.1} parent=0
    _
  %s10 = ssub.s32 1, %s8
  %s11 = scalar_select 0, %s10, %s8
  $region1: #{tpu_custom_call.1} parent=0
    #allocation2 [shape = 'u8[8192]{0}', space=vmem, size = 0x2000, scoped, tag = 'input window, operand 0, single buffered']
    #allocation3 [shape = 's32[1]{0}', space=sflag, size = 0x4, scoped, tag = 'scoped memory for tpu_custom_call.1']
    #allocation4 [shape = 's32[1]{0}', space=sflag, size = 0x4, scoped, tag = 'scoped memory for tpu_custom_call.1']
    #allocation5 [shape = 'u8[512]{0}', space=vmem, size = 0x400, scoped, tag = 'input window, operand 1, single buffered']
    #allocation6 [shape = 's32[1]{0}', space=sflag, size = 0x4, scoped, tag = 'scoped memory for tpu_custom_call.1']
    #allocation7 [shape = 'u8[512]{0}', space=vmem, size = 0x400, scoped, tag = 'input window, operand 2, single buffered']
    #allocation8 [shape = 'u8[98304]{0}', space=vmem, size = 0x18000, scoped, tag = 'input window, operand 3, single buffered']
    #allocation9 [shape = 's32[1]{0}', space=sflag, size = 0x4, scoped, tag = 'scoped memory for tpu_custom_call.1']
    #allocation10 [shape = 'u8[32768]{0}', space=vmem, size = 0x8000, scoped, tag = 'input window, operand 5, single buffered']
    #allocation11 [shape = 'u8[8192]{0}', space=vmem, size = 0x2000, scoped, tag = 'output window, operand 0, single buffered']
    %12 = vsyncpa [#allocation3], 0
    %13 = vsyncpa [#allocation6], 0
    %14 = vsyncpa [#allocation9], 0
    %15 = vsyncpa [#allocation4], 0
    // Predicated region
    $region2: #{tpu_custom_call.1} parent=1 // pred_check
      _
    $region3: #{tpu_custom_call.1} parent=1 // pred_check_branch
      %17 = sbr.rel (0) target = $region5
    $region4: #{tpu_custom_call.1} parent=1 // pred_region
      %19 = vsyncadd [#allocation3], 0
      %s20 = sshll.u32 %s0, 4
      %s21 = int_to_ptr.hbm [resolvable:$true] %s20
      %s22 = sshll.u32 [#allocation2], 4
      %s23 = int_to_ptr.vmem [resolvable:$true] %s22
      %28 = dma.hbm_to_vmem [thread:$0]  %s21, 256, %s23, [#allocation3], 128, 128, 8
    $region5: #{tpu_custom_call.1} parent=1 // pred_fallthru
      _
    // Predicated region
    $region6: #{tpu_custom_call.1} parent=1 // pred_check
      _
    $region7: #{tpu_custom_call.1} parent=1 // pred_check_branch
      %30 = sbr.rel (0) target = $region9
    $region8: #{tpu_custom_call.1} parent=1 // pred_region
      %32 = vsyncadd [#allocation6], 0
      %s34 = sshll.u32 %s1, 4
      %s35 = int_to_ptr.hbm [resolvable:$true] %s34
      %s36 = sshll.u32 [#allocation5], 4
      %s37 = int_to_ptr.vmem [resolvable:$true] %s36
      %39 = dma.hbm_to_vmem [thread:$0]  %s35, 16, %s37, [#allocation6]
    $region9: #{tpu_custom_call.1} parent=1 // pred_fallthru
      _
    // Predicated region
    $region10: #{tpu_custom_call.1} parent=1 // pred_check
      _
    $region11: #{tpu_custom_call.1} parent=1 // pred_check_branch
      %41 = sbr.rel (0) target = $region13
    $region12: #{tpu_custom_call.1} parent=1 // pred_region
      %43 = vsyncadd [#allocation6], 0
      %s45 = sshll.u32 %s2, 4
      %s46 = int_to_ptr.hbm [resolvable:$true] %s45
      %s47 = sshll.u32 [#allocation7], 4
      %s48 = int_to_ptr.vmem [resolvable:$true] %s47
      %50 = dma.hbm_to_vmem [thread:$0]  %s46, 16, %s48, [#allocation6]
    $region13: #{tpu_custom_call.1} parent=1 // pred_fallthru
      _
    // Predicated region
    $region14: #{tpu_custom_call.1} parent=1 // pred_check
      _
    $region15: #{tpu_custom_call.1} parent=1 // pred_check_branch
      %52 = sbr.rel (0) target = $region17
    $region16: #{tpu_custom_call.1} parent=1 // pred_region
      %54 = vsyncadd [#allocation9], 0
      %s55 = sshll.u32 %s3, 4
      %s56 = int_to_ptr.hbm [resolvable:$true] %s55
      %s57 = sshll.u32 [#allocation8], 4
      %s58 = int_to_ptr.vmem [resolvable:$true] %s57
      %63 = dma.hbm_to_vmem [thread:$0]  %s56, 3072, %s58, [#allocation9], 192, 192, 12
    $region17: #{tpu_custom_call.1} parent=1 // pred_fallthru
      _
    // Predicated region
    $region18: #{tpu_custom_call.1} parent=1 // pred_check
      _
    $region19: #{tpu_custom_call.1} parent=1 // pred_check_branch
      %65 = sbr.rel (0) target = $region21
    $region20: #{tpu_custom_call.1} parent=1 // pred_region
      _
    $region21: #{tpu_custom_call.1} parent=1 // pred_fallthru
      _
    // Predicated region
    $region22: #{tpu_custom_call.1} parent=1 // pred_check
      _
    $region23: #{tpu_custom_call.1} parent=1 // pred_check_branch
      %67 = sbr.rel (0) target = $region25
    $region24: #{tpu_custom_call.1} parent=1 // pred_region
      %69 = vsyncadd [#allocation9], 0
      %s70 = sshll.u32 %s5, 4
      %s71 = int_to_ptr.hbm [resolvable:$true] %s70
      %s72 = sshll.u32 [#allocation10], 4
      %s73 = int_to_ptr.vmem [resolvable:$true] %s72
      %78 = dma.hbm_to_vmem [thread:$0]  %s71, 1024, %s73, [#allocation9], 64, 64, 4
    $region25: #{tpu_custom_call.1} parent=1 // pred_fallthru
      _
    // Predicated region
    $region26: #{tpu_custom_call.1} parent=1 // pred_check
      _
    $region27: #{tpu_custom_call.1} parent=1 // pred_check_branch
      %80 = sbr.rel (0) target = $region29
    $region28: #{tpu_custom_call.1} parent=1 // pred_region
      _
    $region29: #{tpu_custom_call.1} parent=1 // pred_fallthru
      _
    // Predicated region
    $region30: #{tpu_custom_call.1} parent=1 // pred_check
      _
    $region31: #{tpu_custom_call.1} parent=1 // pred_check_branch
      %82 = sbr.rel (0) target = $region33
    $region32: #{tpu_custom_call.1} parent=1 // pred_region
      %84 = dma.done [#allocation3], 256
    $region33: #{tpu_custom_call.1} parent=1 // pred_fallthru
      _
    // Predicated region
    $region34: #{tpu_custom_call.1} parent=1 // pred_check
      _
    $region35: #{tpu_custom_call.1} parent=1 // pred_check_branch
      %86 = sbr.rel (0) target = $region37
    $region36: #{tpu_custom_call.1} parent=1 // pred_region
      %88 = dma.done [#allocation6], 16
    $region37: #{tpu_custom_call.1} parent=1 // pred_fallthru
      _
    // Predicated region
    $region38: #{tpu_custom_call.1} parent=1 // pred_check
      _
    $region39: #{tpu_custom_call.1} parent=1 // pred_check_branch
      %90 = sbr.rel (0) target = $region41
    $region40: #{tpu_custom_call.1} parent=1 // pred_region
      %92 = dma.done [#allocation6], 16
    $region41: #{tpu_custom_call.1} parent=1 // pred_fallthru
      _
    // Predicated region
    $region42: #{tpu_custom_call.1} parent=1 // pred_check
      _
    $region43: #{tpu_custom_call.1} parent=1 // pred_check_branch
      %94 = sbr.rel (0) target = $region45
    $region44: #{tpu_custom_call.1} parent=1 // pred_region
      %96 = dma.done [#allocation9], 3072
    $region45: #{tpu_custom_call.1} parent=1 // pred_fallthru
      _
    // Predicated region
    $region46: #{tpu_custom_call.1} parent=1 // pred_check
      _
    $region47: #{tpu_custom_call.1} parent=1 // pred_check_branch
      %98 = sbr.rel (0) target = $region49
    $region48: #{tpu_custom_call.1} parent=1 // pred_region
      %100 = dma.done [#allocation9], 1024
    $region49: #{tpu_custom_call.1} parent=1 // pred_fallthru
      _
    %v102 = vld [vmem:[#allocation2] sm:$0xff]
    %v103 = vld [vmem:[#allocation2 + $0x8] sm:$0xff]
    %104 = vadd.xlane.f32.xlu0 %v102
    %v105 = vpop.xlane.xlu0 %104
    %106 = vadd.xlane.f32.xlu0 %v103
    %v107 = vpop.xlane.xlu0 %106
    %v108 = vrcp.pop 128.0
    %v109 = vmul.f32 128.0, %v108
    %v110 = vsub.f32 1.0, %v109
    %v111 = vmul.f32 %v108, %v110
    %v112 = vadd.f32 %v108, %v111
    %vm113 = vweird.f32 %v108
    %v114 = vsel %vm113, %v108, %v112
    %v115 = vmul.f32 %v105, %v114
    %v116 = vmul.f32 %v107, %v114
    %v117 = vsub.f32 %v102, %v115
    %v118 = vsub.f32 %v103, %v116
    %v119 = vmul.f32 %v117, %v117
    %v120 = vmul.f32 %v118, %v118
    %121 = vadd.xlane.f32.xlu0 %v119
    %v122 = vpop.xlane.xlu0 %121
    %123 = vadd.xlane.f32.xlu0 %v120
    %v124 = vpop.xlane.xlu0 %123
    %v125 = vmul.f32 %v122, %v114
    %v126 = vmul.f32 %v124, %v114
    %v127 = vadd.f32 %v125, 1e-05
    %v128 = vadd.f32 %v126, 1e-05
    %v129 = vrsqrt.pop %v127
    %v130 = vmul.f32 %v129, %v127
    %v131 = vmul.f32 %v130, %v129
    %v132 = vmul.f32 0.5, %v131
    %v133 = vsub.f32 1.5, %v132
    %v134 = vmul.f32 %v129, %v133
    %vm135 = vweird.f32 %v127
    %vm136 = vweird.f32 %v129
    %vm137 = vmor %vm135, %vm136
    %v138 = vsel %vm137, %v129, %v134
    %v139 = vrsqrt.pop %v128
    %v140 = vmul.f32 %v139, %v128
    %v141 = vmul.f32 %v140, %v139
    %v142 = vmul.f32 0.5, %v141
    %v143 = vsub.f32 1.5, %v142
    %v144 = vmul.f32 %v139, %v143
    %vm145 = vweird.f32 %v128
    %vm146 = vweird.f32 %v139
    %vm147 = vmor %vm145, %vm146
    %v148 = vsel %vm147, %v139, %v144
    %v149 = vmul.f32 %v117, %v138
    %v150 = vmul.f32 %v118, %v148
    %v151 = vld [vmem:[#allocation5] sm:$0x1]
    %v153 = vperm.slane %v151, 0
    %v155 = vmul.f32 %v149, %v153
    %v156 = vmul.f32 %v150, %v153
    %v157 = vld [vmem:[#allocation7] sm:$0x1]
    %v159 = vperm.slane %v157, 0
    %v161 = vadd.f32 %v155, %v159
    %v162 = vadd.f32 %v156, %v159
    %v163 = vpack.c.bf16 %v162, %v161
    %v164 = vld [vmem:[#allocation8] sm:$0xff]
    %v165 = vld [vmem:[#allocation8 + $0x8] sm:$0xf]
    %v166 = vld [vmem:[#allocation8 + $0xc] sm:$0xff]
    %v167 = vld [vmem:[#allocation8 + $0x14] sm:$0xf]
    %v168 = vld [vmem:[#allocation8 + $0x18] sm:$0xff]
    %v169 = vld [vmem:[#allocation8 + $0x20] sm:$0xf]
    %v170 = vld [vmem:[#allocation8 + $0x24] sm:$0xff]
    %v171 = vld [vmem:[#allocation8 + $0x2c] sm:$0xf]
    %v172 = vld [vmem:[#allocation8 + $0x30] sm:$0xff]
    %v173 = vld [vmem:[#allocation8 + $0x38] sm:$0xf]
    %v174 = vld [vmem:[#allocation8 + $0x3c] sm:$0xff]
    %v175 = vld [vmem:[#allocation8 + $0x44] sm:$0xf]
    %v176 = vld [vmem:[#allocation8 + $0x48] sm:$0xff]
    %v177 = vld [vmem:[#allocation8 + $0x50] sm:$0xf]
    %v178 = vld [vmem:[#allocation8 + $0x54] sm:$0xff]
    %v179 = vld [vmem:[#allocation8 + $0x5c] sm:$0xf]
    %v180 = vld [vmem:[#allocation8 + $0x60] sm:$0xff]
    %v181 = vld [vmem:[#allocation8 + $0x68] sm:$0xf]
    %v182 = vld [vmem:[#allocation8 + $0x6c] sm:$0xff]
    %v183 = vld [vmem:[#allocation8 + $0x74] sm:$0xf]
    %v184 = vld [vmem:[#allocation8 + $0x78] sm:$0xff]
    %v185 = vld [vmem:[#allocation8 + $0x80] sm:$0xf]
    %v186 = vld [vmem:[#allocation8 + $0x84] sm:$0xff]
    %v187 = vld [vmem:[#allocation8 + $0x8c] sm:$0xf]
    %v188 = vld [vmem:[#allocation8 + $0x90] sm:$0xff]
    %v189 = vld [vmem:[#allocation8 + $0x98] sm:$0xf]
    %v190 = vld [vmem:[#allocation8 + $0x9c] sm:$0xff]
    %v191 = vld [vmem:[#allocation8 + $0xa4] sm:$0xf]
    %v192 = vld [vmem:[#allocation8 + $0xa8] sm:$0xff]
    %v193 = vld [vmem:[#allocation8 + $0xb0] sm:$0xf]
    %v194 = vld [vmem:[#allocation8 + $0xb4] sm:$0xff]
    %v195 = vld [vmem:[#allocation8 + $0xbc] sm:$0xf]
    %v196 = vld [vmem:[%s4] sm:$0x7]
    %v198 = vperm.slane %v196, 0
    %v199 = vperm.slane %v196, 1
    %v200 = vperm.slane %v196, 2
    %v236 = vunpack.c.l.b16 %v164
    %v237 = vunpack.c.h.b16 %v164
    %v238 = vunpack.c.l.b16 %v165
    %v239 = vunpack.c.l.b16 %v166
    %v240 = vunpack.c.h.b16 %v166
    %v241 = vunpack.c.l.b16 %v167
    %v242 = vunpack.c.l.b16 %v168
    %v243 = vunpack.c.h.b16 %v168
    %v244 = vunpack.c.l.b16 %v169
    %v245 = vunpack.c.l.b16 %v170
    %v246 = vunpack.c.h.b16 %v170
    %v247 = vunpack.c.l.b16 %v171
    %v248 = vunpack.c.l.b16 %v172
    %v249 = vunpack.c.h.b16 %v172
    %v250 = vunpack.c.l.b16 %v173
    %v251 = vunpack.c.l.b16 %v174
    %v252 = vunpack.c.h.b16 %v174
    %v253 = vunpack.c.l.b16 %v175
    %v254 = vunpack.c.l.b16 %v176
    %v255 = vunpack.c.h.b16 %v176
    %v256 = vunpack.c.l.b16 %v177
    %v257 = vunpack.c.l.b16 %v178
    %v258 = vunpack.c.h.b16 %v178
    %v259 = vunpack.c.l.b16 %v179
    %v260 = vunpack.c.l.b16 %v180
    %v261 = vunpack.c.h.b16 %v180
    %v262 = vunpack.c.l.b16 %v181
    %v263 = vunpack.c.l.b16 %v182
    %v264 = vunpack.c.h.b16 %v182
    %v265 = vunpack.c.l.b16 %v183
    %v266 = vunpack.c.l.b16 %v184
    %v267 = vunpack.c.h.b16 %v184
    %v268 = vunpack.c.l.b16 %v185
    %v269 = vunpack.c.l.b16 %v186
    %v270 = vunpack.c.h.b16 %v186
    %v271 = vunpack.c.l.b16 %v187
    %v272 = vunpack.c.l.b16 %v188
    %v273 = vunpack.c.h.b16 %v188
    %v274 = vunpack.c.l.b16 %v189
    %v275 = vunpack.c.l.b16 %v190
    %v276 = vunpack.c.h.b16 %v190
    %v277 = vunpack.c.l.b16 %v191
    %v278 = vunpack.c.l.b16 %v192
    %v279 = vunpack.c.h.b16 %v192
    %v280 = vunpack.c.l.b16 %v193
    %v281 = vunpack.c.l.b16 %v194
    %v282 = vunpack.c.h.b16 %v194
    %v283 = vunpack.c.l.b16 %v195
    %v284 = vpack.c.b16 %v239, %v236
    %v285 = vpack.c.b16 %v240, %v237
    %v286 = vpack.c.b16 %v241, %v238
    %v287 = vpack.c.b16 %v245, %v242
    %v288 = vpack.c.b16 %v246, %v243
    %v289 = vpack.c.b16 %v247, %v244
    %v290 = vpack.c.b16 %v251, %v248
    %v291 = vpack.c.b16 %v252, %v249
    %v292 = vpack.c.b16 %v253, %v250
    %v293 = vpack.c.b16 %v257, %v254
    %v294 = vpack.c.b16 %v258, %v255
    %v295 = vpack.c.b16 %v259, %v256
    %v296 = vpack.c.b16 %v263, %v260
    %v297 = vpack.c.b16 %v264, %v261
    %v298 = vpack.c.b16 %v265, %v262
    %v299 = vpack.c.b16 %v269, %v266
    %v300 = vpack.c.b16 %v270, %v267
    %v301 = vpack.c.b16 %v271, %v268
    %v302 = vpack.c.b16 %v275, %v272
    %v303 = vpack.c.b16 %v276, %v273
    %v304 = vpack.c.b16 %v277, %v274
    %v305 = vpack.c.b16 %v281, %v278
    %v306 = vpack.c.b16 %v282, %v279
    %v307 = vpack.c.b16 %v283, %v280
    %332 = vmatpush.bf16.msra.mxu0 %v305
    %333 = vmatpush.bf16.msra.mxu0 %v302
    %334 = vmatpush.bf16.msra.mxu0 %v299
    %335 = vmatpush.bf16.msra.mxu0 %v296
    %336 = vmatpush.bf16.msra.mxu0 %v293
    %337 = vmatpush.bf16.msra.mxu0 %v290
    %338 = vmatpush.bf16.msra.mxu0 %v287
    %339 = vmatpush.bf16.msra.mxu0 %v284
    %340 = vmatmul.bf16.gmra.mxu0 %v163
    %v341 = vpop.f32.mrf.mxu0
    %v342 = vadd.f32 %v198, %v341
    %v343 = vpop.f32.mrf.mxu0
    %v344 = vadd.f32 %v198, %v343
    %345 = vdwg.mxu0
    %346 = vmatpush.bf16.msra.mxu0 %v306
    %347 = vmatpush.bf16.msra.mxu0 %v303
    %348 = vmatpush.bf16.msra.mxu0 %v300
    %349 = vmatpush.bf16.msra.mxu0 %v297
    %350 = vmatpush.bf16.msra.mxu0 %v294
    %351 = vmatpush.bf16.msra.mxu0 %v291
    %352 = vmatpush.bf16.msra.mxu0 %v288
    %353 = vmatpush.bf16.msra.mxu0 %v285
    %354 = vmatmul.bf16.gmra.mxu0 %v163
    %v355 = vpop.f32.mrf.mxu0
    %v356 = vadd.f32 %v199, %v355
    %v357 = vpop.f32.mrf.mxu0
    %v358 = vadd.f32 %v199, %v357
    %359 = vdwg.mxu0
    %360 = vmatpush.bf16.msra.mxu0 %v307
    %361 = vmatpush.bf16.msra.mxu0 %v304
    %362 = vmatpush.bf16.msra.mxu0 %v301
    %363 = vmatpush.bf16.msra.mxu0 %v298
    %364 = vmatpush.bf16.msra.mxu0 %v295
    %365 = vmatpush.bf16.msra.mxu0 %v292
    %366 = vmatpush.bf16.msra.mxu0 %v289
    %367 = vmatpush.bf16.msra.mxu0 %v286
    %368 = vmatmul.bf16.gmra.mxu0 %v163
    %v369 = vpop.f32.mrf.mxu0
    %v370 = vadd.f32 %v200, %v369
    %v371 = vpop.f32.mrf.mxu0
    %v372 = vadd.f32 %v200, %v371
    %373 = vdwg.mxu0
    %376 = vrot.lane.b32.xlu0 %v342, 96
    %v377 = vpop.permute.xlu0 %376
    %378 = vrot.lane.b32.xlu0 %v344, 96
    %v379 = vpop.permute.xlu0 %378
    %382 = vrot.lane.b32.xlu0 %v342, 64
    %v383 = vpop.permute.xlu0 %382
    %384 = vrot.lane.b32.xlu0 %v344, 64
    %v385 = vpop.permute.xlu0 %384
    %388 = vrot.lane.b32.xlu0 %v342, 32
    %v389 = vpop.permute.xlu0 %388
    %390 = vrot.lane.b32.xlu0 %v344, 32
    %v391 = vpop.permute.xlu0 %390
    %v394 = vrot.slane %v383, 4
    %vm395 = vcmask 1047556
    %v396 = vsel %vm395, %v394, %v342
    %v397 = vrot.slane %v342, 4
    %v398 = vsel %vm395, %v383, %v397
    %v400 = vunpack.c.l.s4 1983009808
    %v401 = vunpack.c.0.s8 %v400
    %v402 = vperm.slane %v396, %v401
    %v404 = vunpack.c.l.s4 1983009808
    %v405 = vunpack.c.0.s8 %v404
    %v406 = vperm.slane %v398, %v405
    %v407 = vrot.slane %v389, 4
    %v408 = vsel %vm395, %v407, %v377
    %v409 = vrot.slane %v377, 4
    %v410 = vsel %vm395, %v389, %v409
    %v412 = vunpack.c.l.s4 1983009808
    %v413 = vunpack.c.0.s8 %v412
    %v414 = vperm.slane %v408, %v413
    %v416 = vunpack.c.l.s4 1983009808
    %v417 = vunpack.c.0.s8 %v416
    %v418 = vperm.slane %v410, %v417
    %v419 = vrot.slane %v414, 4
    %v420 = vsel %vm395, %v419, %v402
    %v421 = vrot.slane %v402, 4
    %v422 = vsel %vm395, %v414, %v421
    %v424 = vunpack.c.l.s4 1934713408
    %v425 = vunpack.c.0.s8 %v424
    %v426 = vperm.slane %v420, %v425
    %v428 = vunpack.c.l.s4 1934713408
    %v429 = vunpack.c.0.s8 %v428
    %v430 = vperm.slane %v422, %v429
    %v431 = vrot.slane %v418, 4
    %v432 = vsel %vm395, %v431, %v406
    %v433 = vrot.slane %v406, 4
    %v434 = vsel %vm395, %v418, %v433
    %v436 = vunpack.c.l.s4 1934713408
    %v437 = vunpack.c.0.s8 %v436
    %v438 = vperm.slane %v432, %v437
    %v440 = vunpack.c.l.s4 1934713408
    %v441 = vunpack.c.0.s8 %v440
    %v442 = vperm.slane %v434, %v441
    %v443 = vrot.slane %v426, 4
    %v444 = vsel %vm395, 0.0, %v443
    %v445 = vrot.slane %v430, 4
    %v446 = vsel %vm395, 0.0, %v445
    %v447 = vrot.slane %v438, 4
    %v448 = vsel %vm395, 0.0, %v447
    %v449 = vrot.slane %v442, 4
    %v450 = vsel %vm395, 0.0, %v449
    %v451 = vrot.slane %v385, 4
    %v452 = vsel %vm395, %v451, %v344
    %v453 = vrot.slane %v344, 4
    %v454 = vsel %vm395, %v385, %v453
    %v456 = vunpack.c.l.s4 1983009808
    %v457 = vunpack.c.0.s8 %v456
    %v458 = vperm.slane %v452, %v457
    %v460 = vunpack.c.l.s4 1983009808
    %v461 = vunpack.c.0.s8 %v460
    %v462 = vperm.slane %v454, %v461
    %v463 = vrot.slane %v391, 4
    %v464 = vsel %vm395, %v463, %v379
    %v465 = vrot.slane %v379, 4
    %v466 = vsel %vm395, %v391, %v465
    %v468 = vunpack.c.l.s4 1983009808
    %v469 = vunpack.c.0.s8 %v468
    %v470 = vperm.slane %v464, %v469
    %v472 = vunpack.c.l.s4 1983009808
    %v473 = vunpack.c.0.s8 %v472
    %v474 = vperm.slane %v466, %v473
    %v475 = vrot.slane %v470, 4
    %v476 = vsel %vm395, %v475, %v458
    %v477 = vrot.slane %v458, 4
    %v478 = vsel %vm395, %v470, %v477
    %v480 = vunpack.c.l.s4 1934713408
    %v481 = vunpack.c.0.s8 %v480
    %v482 = vperm.slane %v476, %v481
    %v484 = vunpack.c.l.s4 1934713408
    %v485 = vunpack.c.0.s8 %v484
    %v486 = vperm.slane %v478, %v485
    %v487 = vrot.slane %v474, 4
    %v488 = vsel %vm395, %v487, %v462
    %v489 = vrot.slane %v462, 4
    %v490 = vsel %vm395, %v474, %v489
    %v492 = vunpack.c.l.s4 1934713408
    %v493 = vunpack.c.0.s8 %v492
    %v494 = vperm.slane %v488, %v493
    %v496 = vunpack.c.l.s4 1934713408
    %v497 = vunpack.c.0.s8 %v496
    %v498 = vperm.slane %v490, %v497
    %v499 = vrot.slane %v482, 4
    %v500 = vsel %vm395, 0.0, %v499
    %v501 = vrot.slane %v486, 4
    %v502 = vsel %vm395, 0.0, %v501
    %v503 = vrot.slane %v494, 4
    %v504 = vsel %vm395, 0.0, %v503
    %v505 = vrot.slane %v498, 4
    %v506 = vsel %vm395, 0.0, %v505
    %v507 = vsel %vm395, %v445, %v426
    %v509 = vunpack.c.l.s4 1983009808
    %v510 = vunpack.c.0.s8 %v509
    %v511 = vperm.slane %v507, %v510
    %v512 = vrot.slane %v446, 4
    %v513 = vsel %vm395, %v512, %v444
    %v515 = vunpack.c.l.s4 1983009808
    %v516 = vunpack.c.0.s8 %v515
    %v517 = vperm.slane %v513, %v516
    %v518 = vsel %vm395, %v449, %v438
    %v520 = vunpack.c.l.s4 1983009808
    %v521 = vunpack.c.0.s8 %v520
    %v522 = vperm.slane %v518, %v521
    %v523 = vrot.slane %v450, 4
    %v524 = vsel %vm395, %v523, %v448
    %v526 = vunpack.c.l.s4 1983009808
    %v527 = vunpack.c.0.s8 %v526
    %v528 = vperm.slane %v524, %v527
    %v529 = vrot.slane %v517, 4
    %v530 = vsel %vm395, %v529, %v511
    %v531 = vrot.slane %v511, 4
    %v532 = vsel %vm395, %v517, %v531
    %v534 = vunpack.c.l.s4 1934713408
    %v535 = vunpack.c.0.s8 %v534
    %v536 = vperm.slane %v530, %v535
    %v538 = vunpack.c.l.s4 1934713408
    %v539 = vunpack.c.0.s8 %v538
    %v540 = vperm.slane %v532, %v539
    %v541 = vrot.slane %v528, 4
    %v542 = vsel %vm395, %v541, %v522
    %v543 = vrot.slane %v522, 4
    %v544 = vsel %vm395, %v528, %v543
    %v546 = vunpack.c.l.s4 1934713408
    %v547 = vunpack.c.0.s8 %v546
    %v548 = vperm.slane %v542, %v547
    %v550 = vunpack.c.l.s4 1934713408
    %v551 = vunpack.c.0.s8 %v550
    %v552 = vperm.slane %v544, %v551
    %v553 = vrot.slane %v548, 4
    %v554 = vsel %vm395, %v553, %v536
    %v555 = vrot.slane %v536, 4
    %v556 = vsel %vm395, %v548, %v555
    %v557 = vrot.slane %v552, 4
    %v558 = vsel %vm395, %v557, %v540
    %v559 = vrot.slane %v540, 4
    %v560 = vsel %vm395, %v552, %v559
    %v561 = vsel %vm395, %v501, %v482
    %v563 = vunpack.c.l.s4 1983009808
    %v564 = vunpack.c.0.s8 %v563
    %v565 = vperm.slane %v561, %v564
    %v566 = vrot.slane %v502, 4
    %v567 = vsel %vm395, %v566, %v500
    %v569 = vunpack.c.l.s4 1983009808
    %v570 = vunpack.c.0.s8 %v569
    %v571 = vperm.slane %v567, %v570
    %v572 = vsel %vm395, %v505, %v494
    %v574 = vunpack.c.l.s4 1983009808
    %v575 = vunpack.c.0.s8 %v574
    %v576 = vperm.slane %v572, %v575
    %v577 = vrot.slane %v506, 4
    %v578 = vsel %vm395, %v577, %v504
    %v580 = vunpack.c.l.s4 1983009808
    %v581 = vunpack.c.0.s8 %v580
    %v582 = vperm.slane %v578, %v581
    %v583 = vrot.slane %v571, 4
    %v584 = vsel %vm395, %v583, %v565
    %v585 = vrot.slane %v565, 4
    %v586 = vsel %vm395, %v571, %v585
    %v588 = vunpack.c.l.s4 1934713408
    %v589 = vunpack.c.0.s8 %v588
    %v590 = vperm.slane %v584, %v589
    %v592 = vunpack.c.l.s4 1934713408
    %v593 = vunpack.c.0.s8 %v592
    %v594 = vperm.slane %v586, %v593
    %v595 = vrot.slane %v582, 4
    %v596 = vsel %vm395, %v595, %v576
    %v597 = vrot.slane %v576, 4
    %v598 = vsel %vm395, %v582, %v597
    %v600 = vunpack.c.l.s4 1934713408
    %v601 = vunpack.c.0.s8 %v600
    %v602 = vperm.slane %v596, %v601
    %v604 = vunpack.c.l.s4 1934713408
    %v605 = vunpack.c.0.s8 %v604
    %v606 = vperm.slane %v598, %v605
    %v607 = vrot.slane %v602, 4
    %v608 = vsel %vm395, %v607, %v590
    %v609 = vrot.slane %v590, 4
    %v610 = vsel %vm395, %v602, %v609
    %v611 = vrot.slane %v606, 4
    %v612 = vsel %vm395, %v611, %v594
    %v613 = vrot.slane %v594, 4
    %v614 = vsel %vm395, %v606, %v613
    %617 = vrot.lane.b32.xlu0 %v356, 96
    %v618 = vpop.permute.xlu0 %617
    %619 = vrot.lane.b32.xlu0 %v358, 96
    %v620 = vpop.permute.xlu0 %619
    %623 = vrot.lane.b32.xlu0 %v356, 64
    %v624 = vpop.permute.xlu0 %623
    %625 = vrot.lane.b32.xlu0 %v358, 64
    %v626 = vpop.permute.xlu0 %625
    %629 = vrot.lane.b32.xlu0 %v356, 32
    %v630 = vpop.permute.xlu0 %629
    %631 = vrot.lane.b32.xlu0 %v358, 32
    %v632 = vpop.permute.xlu0 %631
    %v635 = vrot.slane %v624, 4
    %v636 = vsel %vm395, %v635, %v356
    %v637 = vrot.slane %v356, 4
    %v638 = vsel %vm395, %v624, %v637
    %v640 = vunpack.c.l.s4 1983009808
    %v641 = vunpack.c.0.s8 %v640
    %v642 = vperm.slane %v636, %v641
    %v644 = vunpack.c.l.s4 1983009808
    %v645 = vunpack.c.0.s8 %v644
    %v646 = vperm.slane %v638, %v645
    %v647 = vrot.slane %v630, 4
    %v648 = vsel %vm395, %v647, %v618
    %v649 = vrot.slane %v618, 4
    %v650 = vsel %vm395, %v630, %v649
    %v652 = vunpack.c.l.s4 1983009808
    %v653 = vunpack.c.0.s8 %v652
    %v654 = vperm.slane %v648, %v653
    %v656 = vunpack.c.l.s4 1983009808
    %v657 = vunpack.c.0.s8 %v656
    %v658 = vperm.slane %v650, %v657
    %v659 = vrot.slane %v654, 4
    %v660 = vsel %vm395, %v659, %v642
    %v661 = vrot.slane %v642, 4
    %v662 = vsel %vm395, %v654, %v661
    %v664 = vunpack.c.l.s4 1934713408
    %v665 = vunpack.c.0.s8 %v664
    %v666 = vperm.slane %v660, %v665
    %v668 = vunpack.c.l.s4 1934713408
    %v669 = vunpack.c.0.s8 %v668
    %v670 = vperm.slane %v662, %v669
    %v671 = vrot.slane %v658, 4
    %v672 = vsel %vm395, %v671, %v646
    %v673 = vrot.slane %v646, 4
    %v674 = vsel %vm395, %v658, %v673
    %v676 = vunpack.c.l.s4 1934713408
    %v677 = vunpack.c.0.s8 %v676
    %v678 = vperm.slane %v672, %v677
    %v680 = vunpack.c.l.s4 1934713408
    %v681 = vunpack.c.0.s8 %v680
    %v682 = vperm.slane %v674, %v681
    %v683 = vrot.slane %v666, 4
    %v684 = vsel %vm395, 0.0, %v683
    %v685 = vrot.slane %v670, 4
    %v686 = vsel %vm395, 0.0, %v685
    %v687 = vrot.slane %v678, 4
    %v688 = vsel %vm395, 0.0, %v687
    %v689 = vrot.slane %v682, 4
    %v690 = vsel %vm395, 0.0, %v689
    %v691 = vrot.slane %v626, 4
    %v692 = vsel %vm395, %v691, %v358
    %v693 = vrot.slane %v358, 4
    %v694 = vsel %vm395, %v626, %v693
    %v696 = vunpack.c.l.s4 1983009808
    %v697 = vunpack.c.0.s8 %v696
    %v698 = vperm.slane %v692, %v697
    %v700 = vunpack.c.l.s4 1983009808
    %v701 = vunpack.c.0.s8 %v700
    %v702 = vperm.slane %v694, %v701
    %v703 = vrot.slane %v632, 4
    %v704 = vsel %vm395, %v703, %v620
    %v705 = vrot.slane %v620, 4
    %v706 = vsel %vm395, %v632, %v705
    %v708 = vunpack.c.l.s4 1983009808
    %v709 = vunpack.c.0.s8 %v708
    %v710 = vperm.slane %v704, %v709
    %v712 = vunpack.c.l.s4 1983009808
    %v713 = vunpack.c.0.s8 %v712
    %v714 = vperm.slane %v706, %v713
    %v715 = vrot.slane %v710, 4
    %v716 = vsel %vm395, %v715, %v698
    %v717 = vrot.slane %v698, 4
    %v718 = vsel %vm395, %v710, %v717
    %v720 = vunpack.c.l.s4 1934713408
    %v721 = vunpack.c.0.s8 %v720
    %v722 = vperm.slane %v716, %v721
    %v724 = vunpack.c.l.s4 1934713408
    %v725 = vunpack.c.0.s8 %v724
    %v726 = vperm.slane %v718, %v725
    %v727 = vrot.slane %v714, 4
    %v728 = vsel %vm395, %v727, %v702
    %v729 = vrot.slane %v702, 4
    %v730 = vsel %vm395, %v714, %v729
    %v732 = vunpack.c.l.s4 1934713408
    %v733 = vunpack.c.0.s8 %v732
    %v734 = vperm.slane %v728, %v733
    %v736 = vunpack.c.l.s4 1934713408
    %v737 = vunpack.c.0.s8 %v736
    %v738 = vperm.slane %v730, %v737
    %v739 = vrot.slane %v722, 4
    %v740 = vsel %vm395, 0.0, %v739
    %v741 = vrot.slane %v726, 4
    %v742 = vsel %vm395, 0.0, %v741
    %v743 = vrot.slane %v734, 4
    %v744 = vsel %vm395, 0.0, %v743
    %v745 = vrot.slane %v738, 4
    %v746 = vsel %vm395, 0.0, %v745
    %v747 = vsel %vm395, %v685, %v666
    %v749 = vunpack.c.l.s4 1983009808
    %v750 = vunpack.c.0.s8 %v749
    %v751 = vperm.slane %v747, %v750
    %v752 = vrot.slane %v686, 4
    %v753 = vsel %vm395, %v752, %v684
    %v755 = vunpack.c.l.s4 1983009808
    %v756 = vunpack.c.0.s8 %v755
    %v757 = vperm.slane %v753, %v756
    %v758 = vsel %vm395, %v689, %v678
    %v760 = vunpack.c.l.s4 1983009808
    %v761 = vunpack.c.0.s8 %v760
    %v762 = vperm.slane %v758, %v761
    %v763 = vrot.slane %v690, 4
    %v764 = vsel %vm395, %v763, %v688
    %v766 = vunpack.c.l.s4 1983009808
    %v767 = vunpack.c.0.s8 %v766
    %v768 = vperm.slane %v764, %v767
    %v769 = vrot.slane %v757, 4
    %v770 = vsel %vm395, %v769, %v751
    %v771 = vrot.slane %v751, 4
    %v772 = vsel %vm395, %v757, %v771
    %v774 = vunpack.c.l.s4 1934713408
    %v775 = vunpack.c.0.s8 %v774
    %v776 = vperm.slane %v770, %v775
    %v778 = vunpack.c.l.s4 1934713408
    %v779 = vunpack.c.0.s8 %v778
    %v780 = vperm.slane %v772, %v779
    %v781 = vrot.slane %v768, 4
    %v782 = vsel %vm395, %v781, %v762
    %v783 = vrot.slane %v762, 4
    %v784 = vsel %vm395, %v768, %v783
    %v786 = vunpack.c.l.s4 1934713408
    %v787 = vunpack.c.0.s8 %v786
    %v788 = vperm.slane %v782, %v787
    %v790 = vunpack.c.l.s4 1934713408
    %v791 = vunpack.c.0.s8 %v790
    %v792 = vperm.slane %v784, %v791
    %v793 = vrot.slane %v788, 4
    %v794 = vsel %vm395, %v793, %v776
    %v795 = vrot.slane %v776, 4
    %v796 = vsel %vm395, %v788, %v795
    %v797 = vrot.slane %v792, 4
    %v798 = vsel %vm395, %v797, %v780
    %v799 = vrot.slane %v780, 4
    %v800 = vsel %vm395, %v792, %v799
    %v801 = vsel %vm395, %v741, %v722
    %v803 = vunpack.c.l.s4 1983009808
    %v804 = vunpack.c.0.s8 %v803
    %v805 = vperm.slane %v801, %v804
    %v806 = vrot.slane %v742, 4
    %v807 = vsel %vm395, %v806, %v740
    %v809 = vunpack.c.l.s4 1983009808
    %v810 = vunpack.c.0.s8 %v809
    %v811 = vperm.slane %v807, %v810
    %v812 = vsel %vm395, %v745, %v734
    %v814 = vunpack.c.l.s4 1983009808
    %v815 = vunpack.c.0.s8 %v814
    %v816 = vperm.slane %v812, %v815
    %v817 = vrot.slane %v746, 4
    %v818 = vsel %vm395, %v817, %v744
    %v820 = vunpack.c.l.s4 1983009808
    %v821 = vunpack.c.0.s8 %v820
    %v822 = vperm.slane %v818, %v821
    %v823 = vrot.slane %v811, 4
    %v824 = vsel %vm395, %v823, %v805
    %v825 = vrot.slane %v805, 4
    %v826 = vsel %vm395, %v811, %v825
    %v828 = vunpack.c.l.s4 1934713408
    %v829 = vunpack.c.0.s8 %v828
    %v830 = vperm.slane %v824, %v829
    %v832 = vunpack.c.l.s4 1934713408
    %v833 = vunpack.c.0.s8 %v832
    %v834 = vperm.slane %v826, %v833
    %v835 = vrot.slane %v822, 4
    %v836 = vsel %vm395, %v835, %v816
    %v837 = vrot.slane %v816, 4
    %v838 = vsel %vm395, %v822, %v837
    %v840 = vunpack.c.l.s4 1934713408
    %v841 = vunpack.c.0.s8 %v840
    %v842 = vperm.slane %v836, %v841
    %v844 = vunpack.c.l.s4 1934713408
    %v845 = vunpack.c.0.s8 %v844
    %v846 = vperm.slane %v838, %v845
    %v847 = vrot.slane %v842, 4
    %v848 = vsel %vm395, %v847, %v830
    %v849 = vrot.slane %v830, 4
    %v850 = vsel %vm395, %v842, %v849
    %v851 = vrot.slane %v846, 4
    %v852 = vsel %vm395, %v851, %v834
    %v853 = vrot.slane %v834, 4
    %v854 = vsel %vm395, %v846, %v853
    %857 = vrot.lane.b32.xlu0 %v370, 96
    %v858 = vpop.permute.xlu0 %857
    %859 = vrot.lane.b32.xlu0 %v372, 96
    %v860 = vpop.permute.xlu0 %859
    %863 = vrot.lane.b32.xlu0 %v370, 64
    %v864 = vpop.permute.xlu0 %863
    %865 = vrot.lane.b32.xlu0 %v372, 64
    %v866 = vpop.permute.xlu0 %865
    %869 = vrot.lane.b32.xlu0 %v370, 32
    %v870 = vpop.permute.xlu0 %869
    %871 = vrot.lane.b32.xlu0 %v372, 32
    %v872 = vpop.permute.xlu0 %871
    %v875 = vrot.slane %v864, 4
    %v876 = vsel %vm395, %v875, %v370
    %v877 = vrot.slane %v370, 4
    %v878 = vsel %vm395, %v864, %v877
    %v880 = vunpack.c.l.s4 1983009808
    %v881 = vunpack.c.0.s8 %v880
    %v882 = vperm.slane %v876, %v881
    %v884 = vunpack.c.l.s4 1983009808
    %v885 = vunpack.c.0.s8 %v884
    %v886 = vperm.slane %v878, %v885
    %v887 = vrot.slane %v870, 4
    %v888 = vsel %vm395, %v887, %v858
    %v889 = vrot.slane %v858, 4
    %v890 = vsel %vm395, %v870, %v889
    %v892 = vunpack.c.l.s4 1983009808
    %v893 = vunpack.c.0.s8 %v892
    %v894 = vperm.slane %v888, %v893
    %v896 = vunpack.c.l.s4 1983009808
    %v897 = vunpack.c.0.s8 %v896
    %v898 = vperm.slane %v890, %v897
    %v899 = vrot.slane %v894, 4
    %v900 = vsel %vm395, %v899, %v882
    %v901 = vrot.slane %v882, 4
    %v902 = vsel %vm395, %v894, %v901
    %v904 = vunpack.c.l.s4 1934713408
    %v905 = vunpack.c.0.s8 %v904
    %v906 = vperm.slane %v900, %v905
    %v908 = vunpack.c.l.s4 1934713408
    %v909 = vunpack.c.0.s8 %v908
    %v910 = vperm.slane %v902, %v909
    %v911 = vrot.slane %v898, 4
    %v912 = vsel %vm395, %v911, %v886
    %v913 = vrot.slane %v886, 4
    %v914 = vsel %vm395, %v898, %v913
    %v916 = vunpack.c.l.s4 1934713408
    %v917 = vunpack.c.0.s8 %v916
    %v918 = vperm.slane %v912, %v917
    %v920 = vunpack.c.l.s4 1934713408
    %v921 = vunpack.c.0.s8 %v920
    %v922 = vperm.slane %v914, %v921
    %v923 = vrot.slane %v906, 4
    %v924 = vsel %vm395, 0.0, %v923
    %v925 = vrot.slane %v910, 4
    %v926 = vsel %vm395, 0.0, %v925
    %v927 = vrot.slane %v918, 4
    %v928 = vsel %vm395, 0.0, %v927
    %v929 = vrot.slane %v922, 4
    %v930 = vsel %vm395, 0.0, %v929
    %v931 = vrot.slane %v866, 4
    %v932 = vsel %vm395, %v931, %v372
    %v933 = vrot.slane %v372, 4
    %v934 = vsel %vm395, %v866, %v933
    %v936 = vunpack.c.l.s4 1983009808
    %v937 = vunpack.c.0.s8 %v936
    %v938 = vperm.slane %v932, %v937
    %v940 = vunpack.c.l.s4 1983009808
    %v941 = vunpack.c.0.s8 %v940
    %v942 = vperm.slane %v934, %v941
    %v943 = vrot.slane %v872, 4
    %v944 = vsel %vm395, %v943, %v860
    %v945 = vrot.slane %v860, 4
    %v946 = vsel %vm395, %v872, %v945
    %v948 = vunpack.c.l.s4 1983009808
    %v949 = vunpack.c.0.s8 %v948
    %v950 = vperm.slane %v944, %v949
    %v952 = vunpack.c.l.s4 1983009808
    %v953 = vunpack.c.0.s8 %v952
    %v954 = vperm.slane %v946, %v953
    %v955 = vrot.slane %v950, 4
    %v956 = vsel %vm395, %v955, %v938
    %v957 = vrot.slane %v938, 4
    %v958 = vsel %vm395, %v950, %v957
    %v960 = vunpack.c.l.s4 1934713408
    %v961 = vunpack.c.0.s8 %v960
    %v962 = vperm.slane %v956, %v961
    %v964 = vunpack.c.l.s4 1934713408
    %v965 = vunpack.c.0.s8 %v964
    %v966 = vperm.slane %v958, %v965
    %v967 = vrot.slane %v954, 4
    %v968 = vsel %vm395, %v967, %v942
    %v969 = vrot.slane %v942, 4
    %v970 = vsel %vm395, %v954, %v969
    %v972 = vunpack.c.l.s4 1934713408
    %v973 = vunpack.c.0.s8 %v972
    %v974 = vperm.slane %v968, %v973
    %v976 = vunpack.c.l.s4 1934713408
    %v977 = vunpack.c.0.s8 %v976
    %v978 = vperm.slane %v970, %v977
    %v979 = vrot.slane %v962, 4
    %v980 = vsel %vm395, 0.0, %v979
    %v981 = vrot.slane %v966, 4
    %v982 = vsel %vm395, 0.0, %v981
    %v983 = vrot.slane %v974, 4
    %v984 = vsel %vm395, 0.0, %v983
    %v985 = vrot.slane %v978, 4
    %v986 = vsel %vm395, 0.0, %v985
    %v987 = vsel %vm395, %v925, %v906
    %v989 = vunpack.c.l.s4 1983009808
    %v990 = vunpack.c.0.s8 %v989
    %v991 = vperm.slane %v987, %v990
    %v992 = vrot.slane %v926, 4
    %v993 = vsel %vm395, %v992, %v924
    %v995 = vunpack.c.l.s4 1983009808
    %v996 = vunpack.c.0.s8 %v995
    %v997 = vperm.slane %v993, %v996
    %v998 = vsel %vm395, %v929, %v918
    %v1000 = vunpack.c.l.s4 1983009808
    %v1001 = vunpack.c.0.s8 %v1000
    %v1002 = vperm.slane %v998, %v1001
    %v1003 = vrot.slane %v930, 4
    %v1004 = vsel %vm395, %v1003, %v928
    %v1006 = vunpack.c.l.s4 1983009808
    %v1007 = vunpack.c.0.s8 %v1006
    %v1008 = vperm.slane %v1004, %v1007
    %v1009 = vrot.slane %v997, 4
    %v1010 = vsel %vm395, %v1009, %v991
    %v1011 = vrot.slane %v991, 4
    %v1012 = vsel %vm395, %v997, %v1011
    %v1014 = vunpack.c.l.s4 1934713408
    %v1015 = vunpack.c.0.s8 %v1014
    %v1016 = vperm.slane %v1010, %v1015
    %v1018 = vunpack.c.l.s4 1934713408
    %v1019 = vunpack.c.0.s8 %v1018
    %v1020 = vperm.slane %v1012, %v1019
    %v1021 = vrot.slane %v1008, 4
    %v1022 = vsel %vm395, %v1021, %v1002
    %v1023 = vrot.slane %v1002, 4
    %v1024 = vsel %vm395, %v1008, %v1023
    %v1026 = vunpack.c.l.s4 1934713408
    %v1027 = vunpack.c.0.s8 %v1026
    %v1028 = vperm.slane %v1022, %v1027
    %v1030 = vunpack.c.l.s4 1934713408
    %v1031 = vunpack.c.0.s8 %v1030
    %v1032 = vperm.slane %v1024, %v1031
    %v1033 = vrot.slane %v1028, 4
    %v1034 = vsel %vm395, %v1033, %v1016
    %v1035 = vrot.slane %v1016, 4
    %v1036 = vsel %vm395, %v1028, %v1035
    %v1037 = vrot.slane %v1032, 4
    %v1038 = vsel %vm395, %v1037, %v1020
    %v1039 = vrot.slane %v1020, 4
    %v1040 = vsel %vm395, %v1032, %v1039
    %v1041 = vsel %vm395, %v981, %v962
    %v1043 = vunpack.c.l.s4 1983009808
    %v1044 = vunpack.c.0.s8 %v1043
    %v1045 = vperm.slane %v1041, %v1044
    %v1046 = vrot.slane %v982, 4
    %v1047 = vsel %vm395, %v1046, %v980
    %v1049 = vunpack.c.l.s4 1983009808
    %v1050 = vunpack.c.0.s8 %v1049
    %v1051 = vperm.slane %v1047, %v1050
    %v1052 = vsel %vm395, %v985, %v974
    %v1054 = vunpack.c.l.s4 1983009808
    %v1055 = vunpack.c.0.s8 %v1054
    %v1056 = vperm.slane %v1052, %v1055
    %v1057 = vrot.slane %v986, 4
    %v1058 = vsel %vm395, %v1057, %v984
    %v1060 = vunpack.c.l.s4 1983009808
    %v1061 = vunpack.c.0.s8 %v1060
    %v1062 = vperm.slane %v1058, %v1061
    %v1063 = vrot.slane %v1051, 4
    %v1064 = vsel %vm395, %v1063, %v1045
    %v1065 = vrot.slane %v1045, 4
    %v1066 = vsel %vm395, %v1051, %v1065
    %v1068 = vunpack.c.l.s4 1934713408
    %v1069 = vunpack.c.0.s8 %v1068
    %v1070 = vperm.slane %v1064, %v1069
    %v1072 = vunpack.c.l.s4 1934713408
    %v1073 = vunpack.c.0.s8 %v1072
    %v1074 = vperm.slane %v1066, %v1073
    %v1075 = vrot.slane %v1062, 4
    %v1076 = vsel %vm395, %v1075, %v1056
    %v1077 = vrot.slane %v1056, 4
    %v1078 = vsel %vm395, %v1062, %v1077
    %v1080 = vunpack.c.l.s4 1934713408
    %v1081 = vunpack.c.0.s8 %v1080
    %v1082 = vperm.slane %v1076, %v1081
    %v1084 = vunpack.c.l.s4 1934713408
    %v1085 = vunpack.c.0.s8 %v1084
    %v1086 = vperm.slane %v1078, %v1085
    %v1087 = vrot.slane %v1082, 4
    %v1088 = vsel %vm395, %v1087, %v1070
    %v1089 = vrot.slane %v1070, 4
    %v1090 = vsel %vm395, %v1082, %v1089
    %v1091 = vrot.slane %v1086, 4
    %v1092 = vsel %vm395, %v1091, %v1074
    %v1093 = vrot.slane %v1074, 4
    %v1094 = vsel %vm395, %v1086, %v1093
    %vm1095 = vcmask 261120
    %v1097 = vsel %vm1095, %v554, 0
    %v1100 = vsel %vm1095, %v794, 0
    %1102 = vmatpush.xpose.msra.mxu0 0.0
    %1103 = vmatpush.xpose.msra.mxu0 0.0
    %1104 = vmatpush.xpose.msra.mxu0 0.0
    %1105 = vmatpush.xpose.msra.mxu0 0.0
    %1106 = vmatpush.xpose.msra.mxu0 0.0
    %1107 = vmatpush.xpose.msra.mxu0 0.0
    %1108 = vmatpush.xpose.msra.mxu0 0.0
    %1109 = vmatpush.xpose.msra.mxu0 0.0
    %1110 = vmatpush.xpose.msra.mxu0 0.0
    %1111 = vmatpush.xpose.msra.mxu0 0.0
    %1112 = vmatpush.xpose.msra.mxu0 0.0
    %1113 = vmatpush.xpose.msra.mxu0 0.0
    %1114 = vmatpush.xpose.msra.mxu0 0.0
    %1115 = vmatpush.xpose.msra.mxu0 0.0
    %1116 = vmatpush.xpose.msra.mxu0 0.0
    %1117 = vmatpush.xpose.msra.mxu0 %v1100
    %1118 = vmatmul.f32.gmra.mxu0 %v1097
    %v1119 = vpop.f32.mrf.mxu0
    %v1120 = vadd.f32 0.0, %v1119
    %1121 = vdwg.mxu0
    %v1123 = vsel %vm1095, %v556, 0
    %v1126 = vsel %vm1095, %v796, 0
    %1128 = vmatpush.xpose.msra.mxu0 0.0
    %1129 = vmatpush.xpose.msra.mxu0 0.0
    %1130 = vmatpush.xpose.msra.mxu0 0.0
    %1131 = vmatpush.xpose.msra.mxu0 0.0
    %1132 = vmatpush.xpose.msra.mxu0 0.0
    %1133 = vmatpush.xpose.msra.mxu0 0.0
    %1134 = vmatpush.xpose.msra.mxu0 0.0
    %1135 = vmatpush.xpose.msra.mxu0 0.0
    %1136 = vmatpush.xpose.msra.mxu0 0.0
    %1137 = vmatpush.xpose.msra.mxu0 0.0
    %1138 = vmatpush.xpose.msra.mxu0 0.0
    %1139 = vmatpush.xpose.msra.mxu0 0.0
    %1140 = vmatpush.xpose.msra.mxu0 0.0
    %1141 = vmatpush.xpose.msra.mxu0 0.0
    %1142 = vmatpush.xpose.msra.mxu0 0.0
    %1143 = vmatpush.xpose.msra.mxu0 %v1126
    %1144 = vmatmul.f32.gmra.mxu0 %v1123
    %v1145 = vpop.f32.mrf.mxu0
    %v1146 = vadd.f32 0.0, %v1145
    %1147 = vdwg.mxu0
    %v1149 = vsel %vm1095, %v558, 0
    %v1152 = vsel %vm1095, %v798, 0
    %1154 = vmatpush.xpose.msra.mxu0 0.0
    %1155 = vmatpush.xpose.msra.mxu0 0.0
    %1156 = vmatpush.xpose.msra.mxu0 0.0
    %1157 = vmatpush.xpose.msra.mxu0 0.0
    %1158 = vmatpush.xpose.msra.mxu0 0.0
    %1159 = vmatpush.xpose.msra.mxu0 0.0
    %1160 = vmatpush.xpose.msra.mxu0 0.0
    %1161 = vmatpush.xpose.msra.mxu0 0.0
    %1162 = vmatpush.xpose.msra.mxu0 0.0
    %1163 = vmatpush.xpose.msra.mxu0 0.0
    %1164 = vmatpush.xpose.msra.mxu0 0.0
    %1165 = vmatpush.xpose.msra.mxu0 0.0
    %1166 = vmatpush.xpose.msra.mxu0 0.0
    %1167 = vmatpush.xpose.msra.mxu0 0.0
    %1168 = vmatpush.xpose.msra.mxu0 0.0
    %1169 = vmatpush.xpose.msra.mxu0 %v1152
    %1170 = vmatmul.f32.gmra.mxu0 %v1149
    %v1171 = vpop.f32.mrf.mxu0
    %v1172 = vadd.f32 0.0, %v1171
    %1173 = vdwg.mxu0
    %v1175 = vsel %vm1095, %v560, 0
    %v1178 = vsel %vm1095, %v800, 0
    %1180 = vmatpush.xpose.msra.mxu0 0.0
    %1181 = vmatpush.xpose.msra.mxu0 0.0
    %1182 = vmatpush.xpose.msra.mxu0 0.0
    %1183 = vmatpush.xpose.msra.mxu0 0.0
    %1184 = vmatpush.xpose.msra.mxu0 0.0
    %1185 = vmatpush.xpose.msra.mxu0 0.0
    %1186 = vmatpush.xpose.msra.mxu0 0.0
    %1187 = vmatpush.xpose.msra.mxu0 0.0
    %1188 = vmatpush.xpose.msra.mxu0 0.0
    %1189 = vmatpush.xpose.msra.mxu0 0.0
    %1190 = vmatpush.xpose.msra.mxu0 0.0
    %1191 = vmatpush.xpose.msra.mxu0 0.0
    %1192 = vmatpush.xpose.msra.mxu0 0.0
    %1193 = vmatpush.xpose.msra.mxu0 0.0
    %1194 = vmatpush.xpose.msra.mxu0 0.0
    %1195 = vmatpush.xpose.msra.mxu0 %v1178
    %1196 = vmatmul.f32.gmra.mxu0 %v1175
    %v1197 = vpop.f32.mrf.mxu0
    %v1198 = vadd.f32 0.0, %v1197
    %1199 = vdwg.mxu0
    %v1201 = vsel %vm1095, %v608, 0
    %v1204 = vsel %vm1095, %v848, 0
    %1206 = vmatpush.xpose.msra.mxu0 0.0
    %1207 = vmatpush.xpose.msra.mxu0 0.0
    %1208 = vmatpush.xpose.msra.mxu0 0.0
    %1209 = vmatpush.xpose.msra.mxu0 0.0
    %1210 = vmatpush.xpose.msra.mxu0 0.0
    %1211 = vmatpush.xpose.msra.mxu0 0.0
    %1212 = vmatpush.xpose.msra.mxu0 0.0
    %1213 = vmatpush.xpose.msra.mxu0 0.0
    %1214 = vmatpush.xpose.msra.mxu0 0.0
    %1215 = vmatpush.xpose.msra.mxu0 0.0
    %1216 = vmatpush.xpose.msra.mxu0 0.0
    %1217 = vmatpush.xpose.msra.mxu0 0.0
    %1218 = vmatpush.xpose.msra.mxu0 0.0
    %1219 = vmatpush.xpose.msra.mxu0 0.0
    %1220 = vmatpush.xpose.msra.mxu0 0.0
    %1221 = vmatpush.xpose.msra.mxu0 %v1204
    %1222 = vmatmul.f32.gmra.mxu0 %v1201
    %v1223 = vpop.f32.mrf.mxu0
    %v1224 = vadd.f32 0.0, %v1223
    %1225 = vdwg.mxu0
    %v1227 = vsel %vm1095, %v610, 0
    %v1230 = vsel %vm1095, %v850, 0
    %1232 = vmatpush.xpose.msra.mxu0 0.0
    %1233 = vmatpush.xpose.msra.mxu0 0.0
    %1234 = vmatpush.xpose.msra.mxu0 0.0
    %1235 = vmatpush.xpose.msra.mxu0 0.0
    %1236 = vmatpush.xpose.msra.mxu0 0.0
    %1237 = vmatpush.xpose.msra.mxu0 0.0
    %1238 = vmatpush.xpose.msra.mxu0 0.0
    %1239 = vmatpush.xpose.msra.mxu0 0.0
    %1240 = vmatpush.xpose.msra.mxu0 0.0
    %1241 = vmatpush.xpose.msra.mxu0 0.0
    %1242 = vmatpush.xpose.msra.mxu0 0.0
    %1243 = vmatpush.xpose.msra.mxu0 0.0
    %1244 = vmatpush.xpose.msra.mxu0 0.0
    %1245 = vmatpush.xpose.msra.mxu0 0.0
    %1246 = vmatpush.xpose.msra.mxu0 0.0
    %1247 = vmatpush.xpose.msra.mxu0 %v1230
    %1248 = vmatmul.f32.gmra.mxu0 %v1227
    %v1249 = vpop.f32.mrf.mxu0
    %v1250 = vadd.f32 0.0, %v1249
    %1251 = vdwg.mxu0
    %v1253 = vsel %vm1095, %v612, 0
    %v1256 = vsel %vm1095, %v852, 0
    %1258 = vmatpush.xpose.msra.mxu0 0.0
    %1259 = vmatpush.xpose.msra.mxu0 0.0
    %1260 = vmatpush.xpose.msra.mxu0 0.0
    %1261 = vmatpush.xpose.msra.mxu0 0.0
    %1262 = vmatpush.xpose.msra.mxu0 0.0
    %1263 = vmatpush.xpose.msra.mxu0 0.0
    %1264 = vmatpush.xpose.msra.mxu0 0.0
    %1265 = vmatpush.xpose.msra.mxu0 0.0
    %1266 = vmatpush.xpose.msra.mxu0 0.0
    %1267 = vmatpush.xpose.msra.mxu0 0.0
    %1268 = vmatpush.xpose.msra.mxu0 0.0
    %1269 = vmatpush.xpose.msra.mxu0 0.0
    %1270 = vmatpush.xpose.msra.mxu0 0.0
    %1271 = vmatpush.xpose.msra.mxu0 0.0
    %1272 = vmatpush.xpose.msra.mxu0 0.0
    %1273 = vmatpush.xpose.msra.mxu0 %v1256
    %1274 = vmatmul.f32.gmra.mxu0 %v1253
    %v1275 = vpop.f32.mrf.mxu0
    %v1276 = vadd.f32 0.0, %v1275
    %1277 = vdwg.mxu0
    %v1279 = vsel %vm1095, %v614, 0
    %v1282 = vsel %vm1095, %v854, 0
    %1284 = vmatpush.xpose.msra.mxu0 0.0
    %1285 = vmatpush.xpose.msra.mxu0 0.0
    %1286 = vmatpush.xpose.msra.mxu0 0.0
    %1287 = vmatpush.xpose.msra.mxu0 0.0
    %1288 = vmatpush.xpose.msra.mxu0 0.0
    %1289 = vmatpush.xpose.msra.mxu0 0.0
    %1290 = vmatpush.xpose.msra.mxu0 0.0
    %1291 = vmatpush.xpose.msra.mxu0 0.0
    %1292 = vmatpush.xpose.msra.mxu0 0.0
    %1293 = vmatpush.xpose.msra.mxu0 0.0
    %1294 = vmatpush.xpose.msra.mxu0 0.0
    %1295 = vmatpush.xpose.msra.mxu0 0.0
    %1296 = vmatpush.xpose.msra.mxu0 0.0
    %1297 = vmatpush.xpose.msra.mxu0 0.0
    %1298 = vmatpush.xpose.msra.mxu0 0.0
    %1299 = vmatpush.xpose.msra.mxu0 %v1282
    %1300 = vmatmul.f32.gmra.mxu0 %v1279
    %v1301 = vpop.f32.mrf.mxu0
    %v1302 = vadd.f32 0.0, %v1301
    %1303 = vdwg.mxu0
    %vm1304 = vcmask 64512
    %v1305 = vsel %vm1304, %v1120, -inf
    %1306 = vmax.xlane.f32.xlu0 %v1305
    %v1307 = vpop.xlane.xlu0 %1306
    %v1308 = vsel %vm1304, %v1146, -inf
    %1309 = vmax.xlane.f32.xlu0 %v1308
    %v1310 = vpop.xlane.xlu0 %1309
    %v1311 = vsel %vm1304, %v1172, -inf
    %1312 = vmax.xlane.f32.xlu0 %v1311
    %v1313 = vpop.xlane.xlu0 %1312
    %v1314 = vsel %vm1304, %v1198, -inf
    %1315 = vmax.xlane.f32.xlu0 %v1314
    %v1316 = vpop.xlane.xlu0 %1315
    %v1317 = vsel %vm1304, %v1224, -inf
    %1318 = vmax.xlane.f32.xlu0 %v1317
    %v1319 = vpop.xlane.xlu0 %1318
    %v1320 = vsel %vm1304, %v1250, -inf
    %1321 = vmax.xlane.f32.xlu0 %v1320
    %v1322 = vpop.xlane.xlu0 %1321
    %v1323 = vsel %vm1304, %v1276, -inf
    %1324 = vmax.xlane.f32.xlu0 %v1323
    %v1325 = vpop.xlane.xlu0 %1324
    %v1326 = vsel %vm1304, %v1302, -inf
    %1327 = vmax.xlane.f32.xlu0 %v1326
    %v1328 = vpop.xlane.xlu0 %1327
    %v1329 = vsub.f32 %v1120, %v1307
    %v1330 = vsub.f32 %v1146, %v1310
    %v1331 = vsub.f32 %v1172, %v1313
    %v1332 = vsub.f32 %v1198, %v1316
    %v1333 = vsub.f32 %v1224, %v1319
    %v1334 = vsub.f32 %v1250, %v1322
    %v1335 = vsub.f32 %v1276, %v1325
    %v1336 = vsub.f32 %v1302, %v1328
    %v1337 = vmul.f32 %v1329, 1.442695
    %v1338 = vpow.pop %v1337
    %v1339 = vmul.f32 %v1330, 1.442695
    %v1340 = vpow.pop %v1339
    %v1341 = vmul.f32 %v1331, 1.442695
    %v1342 = vpow.pop %v1341
    %v1343 = vmul.f32 %v1332, 1.442695
    %v1344 = vpow.pop %v1343
    %v1345 = vmul.f32 %v1333, 1.442695
    %v1346 = vpow.pop %v1345
    %v1347 = vmul.f32 %v1334, 1.442695
    %v1348 = vpow.pop %v1347
    %v1349 = vmul.f32 %v1335, 1.442695
    %v1350 = vpow.pop %v1349
    %v1351 = vmul.f32 %v1336, 1.442695
    %v1352 = vpow.pop %v1351
    %v1353 = vsel %vm1304, %v1338, 0.0
    %1354 = vadd.xlane.f32.xlu0 %v1353
    %v1355 = vpop.xlane.xlu0 %1354
    %v1356 = vsel %vm1304, %v1340, 0.0
    %1357 = vadd.xlane.f32.xlu0 %v1356
    %v1358 = vpop.xlane.xlu0 %1357
    %v1359 = vsel %vm1304, %v1342, 0.0
    %1360 = vadd.xlane.f32.xlu0 %v1359
    %v1361 = vpop.xlane.xlu0 %1360
    %v1362 = vsel %vm1304, %v1344, 0.0
    %1363 = vadd.xlane.f32.xlu0 %v1362
    %v1364 = vpop.xlane.xlu0 %1363
    %v1365 = vsel %vm1304, %v1346, 0.0
    %1366 = vadd.xlane.f32.xlu0 %v1365
    %v1367 = vpop.xlane.xlu0 %1366
    %v1368 = vsel %vm1304, %v1348, 0.0
    %1369 = vadd.xlane.f32.xlu0 %v1368
    %v1370 = vpop.xlane.xlu0 %1369
    %v1371 = vsel %vm1304, %v1350, 0.0
    %1372 = vadd.xlane.f32.xlu0 %v1371
    %v1373 = vpop.xlane.xlu0 %1372
    %v1374 = vsel %vm1304, %v1352, 0.0
    %1375 = vadd.xlane.f32.xlu0 %v1374
    %v1376 = vpop.xlane.xlu0 %1375
    %v1377 = vrcp.pop %v1355
    %v1378 = vmul.f32 %v1355, %v1377
    %v1379 = vsub.f32 1.0, %v1378
    %v1380 = vmul.f32 %v1377, %v1379
    %v1381 = vadd.f32 %v1377, %v1380
    %vm1382 = vweird.f32 %v1355
    %vm1383 = vweird.f32 %v1377
    %vm1384 = vmor %vm1382, %vm1383
    %v1385 = vsel %vm1384, %v1377, %v1381
    %v1386 = vand.u32 2147483647, %v1355
    %vm1387 = vcmp.eq.f32.partialorder %v1386, 8.507059e+37
    %v1388 = vand.u32 %v1355, 2147483648
    %v1389 = vor.u32 1.1754944e-38, %v1388
    %v1390 = vsel %vm1387, %v1389, %v1385
    %v1391 = vmul.f32 %v1338, %v1390
    %v1392 = vrcp.pop %v1358
    %v1393 = vmul.f32 %v1358, %v1392
    %v1394 = vsub.f32 1.0, %v1393
    %v1395 = vmul.f32 %v1392, %v1394
    %v1396 = vadd.f32 %v1392, %v1395
    %vm1397 = vweird.f32 %v1358
    %vm1398 = vweird.f32 %v1392
    %vm1399 = vmor %vm1397, %vm1398
    %v1400 = vsel %vm1399, %v1392, %v1396
    %v1401 = vand.u32 2147483647, %v1358
    %vm1402 = vcmp.eq.f32.partialorder %v1401, 8.507059e+37
    %v1403 = vand.u32 %v1358, 2147483648
    %v1404 = vor.u32 1.1754944e-38, %v1403
    %v1405 = vsel %vm1402, %v1404, %v1400
    %v1406 = vmul.f32 %v1340, %v1405
    %v1407 = vrcp.pop %v1361
    %v1408 = vmul.f32 %v1361, %v1407
    %v1409 = vsub.f32 1.0, %v1408
    %v1410 = vmul.f32 %v1407, %v1409
    %v1411 = vadd.f32 %v1407, %v1410
    %vm1412 = vweird.f32 %v1361
    %vm1413 = vweird.f32 %v1407
    %vm1414 = vmor %vm1412, %vm1413
    %v1415 = vsel %vm1414, %v1407, %v1411
    %v1416 = vand.u32 2147483647, %v1361
    %vm1417 = vcmp.eq.f32.partialorder %v1416, 8.507059e+37
    %v1418 = vand.u32 %v1361, 2147483648
    %v1419 = vor.u32 1.1754944e-38, %v1418
    %v1420 = vsel %vm1417, %v1419, %v1415
    %v1421 = vmul.f32 %v1342, %v1420
    %v1422 = vrcp.pop %v1364
    %v1423 = vmul.f32 %v1364, %v1422
    %v1424 = vsub.f32 1.0, %v1423
    %v1425 = vmul.f32 %v1422, %v1424
    %v1426 = vadd.f32 %v1422, %v1425
    %vm1427 = vweird.f32 %v1364
    %vm1428 = vweird.f32 %v1422
    %vm1429 = vmor %vm1427, %vm1428
    %v1430 = vsel %vm1429, %v1422, %v1426
    %v1431 = vand.u32 2147483647, %v1364
    %vm1432 = vcmp.eq.f32.partialorder %v1431, 8.507059e+37
    %v1433 = vand.u32 %v1364, 2147483648
    %v1434 = vor.u32 1.1754944e-38, %v1433
    %v1435 = vsel %vm1432, %v1434, %v1430
    %v1436 = vmul.f32 %v1344, %v1435
    %v1437 = vrcp.pop %v1367
    %v1438 = vmul.f32 %v1367, %v1437
    %v1439 = vsub.f32 1.0, %v1438
    %v1440 = vmul.f32 %v1437, %v1439
    %v1441 = vadd.f32 %v1437, %v1440
    %vm1442 = vweird.f32 %v1367
    %vm1443 = vweird.f32 %v1437
    %vm1444 = vmor %vm1442, %vm1443
    %v1445 = vsel %vm1444, %v1437, %v1441
    %v1446 = vand.u32 2147483647, %v1367
    %vm1447 = vcmp.eq.f32.partialorder %v1446, 8.507059e+37
    %v1448 = vand.u32 %v1367, 2147483648
    %v1449 = vor.u32 1.1754944e-38, %v1448
    %v1450 = vsel %vm1447, %v1449, %v1445
    %v1451 = vmul.f32 %v1346, %v1450
    %v1452 = vrcp.pop %v1370
    %v1453 = vmul.f32 %v1370, %v1452
    %v1454 = vsub.f32 1.0, %v1453
    %v1455 = vmul.f32 %v1452, %v1454
    %v1456 = vadd.f32 %v1452, %v1455
    %vm1457 = vweird.f32 %v1370
    %vm1458 = vweird.f32 %v1452
    %vm1459 = vmor %vm1457, %vm1458
    %v1460 = vsel %vm1459, %v1452, %v1456
    %v1461 = vand.u32 2147483647, %v1370
    %vm1462 = vcmp.eq.f32.partialorder %v1461, 8.507059e+37
    %v1463 = vand.u32 %v1370, 2147483648
    %v1464 = vor.u32 1.1754944e-38, %v1463
    %v1465 = vsel %vm1462, %v1464, %v1460
    %v1466 = vmul.f32 %v1348, %v1465
    %v1467 = vrcp.pop %v1373
    %v1468 = vmul.f32 %v1373, %v1467
    %v1469 = vsub.f32 1.0, %v1468
    %v1470 = vmul.f32 %v1467, %v1469
    %v1471 = vadd.f32 %v1467, %v1470
    %vm1472 = vweird.f32 %v1373
    %vm1473 = vweird.f32 %v1467
    %vm1474 = vmor %vm1472, %vm1473
    %v1475 = vsel %vm1474, %v1467, %v1471
    %v1476 = vand.u32 2147483647, %v1373
    %vm1477 = vcmp.eq.f32.partialorder %v1476, 8.507059e+37
    %v1478 = vand.u32 %v1373, 2147483648
    %v1479 = vor.u32 1.1754944e-38, %v1478
    %v1480 = vsel %vm1477, %v1479, %v1475
    %v1481 = vmul.f32 %v1350, %v1480
    %v1482 = vrcp.pop %v1376
    %v1483 = vmul.f32 %v1376, %v1482
    %v1484 = vsub.f32 1.0, %v1483
    %v1485 = vmul.f32 %v1482, %v1484
    %v1486 = vadd.f32 %v1482, %v1485
    %vm1487 = vweird.f32 %v1376
    %vm1488 = vweird.f32 %v1482
    %vm1489 = vmor %vm1487, %vm1488
    %v1490 = vsel %vm1489, %v1482, %v1486
    %v1491 = vand.u32 2147483647, %v1376
    %vm1492 = vcmp.eq.f32.partialorder %v1491, 8.507059e+37
    %v1493 = vand.u32 %v1376, 2147483648
    %v1494 = vor.u32 1.1754944e-38, %v1493
    %v1495 = vsel %vm1492, %v1494, %v1490
    %v1496 = vmul.f32 %v1352, %v1495
    %v1497 = vpack.c.bf16 %v1391, %v1391
    %v1498 = vpack.c.bf16 %v1406, %v1406
    %v1499 = vpack.c.bf16 %v1421, %v1421
    %v1500 = vpack.c.bf16 %v1436, %v1436
    %v1501 = vpack.c.bf16 %v1451, %v1451
    %v1502 = vpack.c.bf16 %v1466, %v1466
    %v1503 = vpack.c.bf16 %v1481, %v1481
    %v1504 = vpack.c.bf16 %v1496, %v1496
    %v1505 = vpack.c.bf16 %v1034, %v1034
    %v1506 = vpack.c.bf16 %v1036, %v1036
    %v1507 = vpack.c.bf16 %v1038, %v1038
    %v1508 = vpack.c.bf16 %v1040, %v1040
    %v1509 = vpack.c.bf16 %v1088, %v1088
    %v1510 = vpack.c.bf16 %v1090, %v1090
    %v1511 = vpack.c.bf16 %v1092, %v1092
    %v1512 = vpack.c.bf16 %v1094, %v1094
    %v1514 = vsel %vm1304, %v1497, 0
    %vm1516 = vcmask 1043456
    %v1518 = vsel %vm1516, %v1505, 0
    %1520 = vmatpush.bf16.msra.mxu0 0
    %1521 = vmatpush.bf16.msra.mxu0 0
    %1522 = vmatpush.bf16.msra.mxu0 0
    %1523 = vmatpush.bf16.msra.mxu0 0
    %1524 = vmatpush.bf16.msra.mxu0 0
    %1525 = vmatpush.bf16.msra.mxu0 0
    %1526 = vmatpush.bf16.msra.mxu0 0
    %1527 = vmatpush.bf16.msra.mxu0 %v1518
    %1528 = vmatmul.bf16.gmra.mxu0 %v1514
    %v1529 = vpop.f32.mrf.mxu0
    %v1530 = vadd.f32 0.0, %v1529
    %v1531 = vpop.f32.mrf.mxu0
    %1532 = vdwg.mxu0
    %v1534 = vsel %vm1304, %v1498, 0
    %v1537 = vsel %vm1516, %v1506, 0
    %1539 = vmatpush.bf16.msra.mxu0 0
    %1540 = vmatpush.bf16.msra.mxu0 0
    %1541 = vmatpush.bf16.msra.mxu0 0
    %1542 = vmatpush.bf16.msra.mxu0 0
    %1543 = vmatpush.bf16.msra.mxu0 0
    %1544 = vmatpush.bf16.msra.mxu0 0
    %1545 = vmatpush.bf16.msra.mxu0 0
    %1546 = vmatpush.bf16.msra.mxu0 %v1537
    %1547 = vmatmul.bf16.gmra.mxu0 %v1534
    %v1548 = vpop.f32.mrf.mxu0
    %v1549 = vadd.f32 0.0, %v1548
    %v1550 = vpop.f32.mrf.mxu0
    %1551 = vdwg.mxu0
    %v1553 = vsel %vm1304, %v1499, 0
    %v1556 = vsel %vm1516, %v1507, 0
    %1558 = vmatpush.bf16.msra.mxu0 0
    %1559 = vmatpush.bf16.msra.mxu0 0
    %1560 = vmatpush.bf16.msra.mxu0 0
    %1561 = vmatpush.bf16.msra.mxu0 0
    %1562 = vmatpush.bf16.msra.mxu0 0
    %1563 = vmatpush.bf16.msra.mxu0 0
    %1564 = vmatpush.bf16.msra.mxu0 0
    %1565 = vmatpush.bf16.msra.mxu0 %v1556
    %1566 = vmatmul.bf16.gmra.mxu0 %v1553
    %v1567 = vpop.f32.mrf.mxu0
    %v1568 = vadd.f32 0.0, %v1567
    %v1569 = vpop.f32.mrf.mxu0
    %1570 = vdwg.mxu0
    %v1572 = vsel %vm1304, %v1500, 0
    %v1575 = vsel %vm1516, %v1508, 0
    %1577 = vmatpush.bf16.msra.mxu0 0
    %1578 = vmatpush.bf16.msra.mxu0 0
    %1579 = vmatpush.bf16.msra.mxu0 0
    %1580 = vmatpush.bf16.msra.mxu0 0
    %1581 = vmatpush.bf16.msra.mxu0 0
    %1582 = vmatpush.bf16.msra.mxu0 0
    %1583 = vmatpush.bf16.msra.mxu0 0
    %1584 = vmatpush.bf16.msra.mxu0 %v1575
    %1585 = vmatmul.bf16.gmra.mxu0 %v1572
    %v1586 = vpop.f32.mrf.mxu0
    %v1587 = vadd.f32 0.0, %v1586
    %v1588 = vpop.f32.mrf.mxu0
    %1589 = vdwg.mxu0
    %v1591 = vsel %vm1304, %v1501, 0
    %v1594 = vsel %vm1516, %v1509, 0
    %1596 = vmatpush.bf16.msra.mxu0 0
    %1597 = vmatpush.bf16.msra.mxu0 0
    %1598 = vmatpush.bf16.msra.mxu0 0
    %1599 = vmatpush.bf16.msra.mxu0 0
    %1600 = vmatpush.bf16.msra.mxu0 0
    %1601 = vmatpush.bf16.msra.mxu0 0
    %1602 = vmatpush.bf16.msra.mxu0 0
    %1603 = vmatpush.bf16.msra.mxu0 %v1594
    %1604 = vmatmul.bf16.gmra.mxu0 %v1591
    %v1605 = vpop.f32.mrf.mxu0
    %v1606 = vadd.f32 0.0, %v1605
    %v1607 = vpop.f32.mrf.mxu0
    %1608 = vdwg.mxu0
    %v1610 = vsel %vm1304, %v1502, 0
    %v1613 = vsel %vm1516, %v1510, 0
    %1615 = vmatpush.bf16.msra.mxu0 0
    %1616 = vmatpush.bf16.msra.mxu0 0
    %1617 = vmatpush.bf16.msra.mxu0 0
    %1618 = vmatpush.bf16.msra.mxu0 0
    %1619 = vmatpush.bf16.msra.mxu0 0
    %1620 = vmatpush.bf16.msra.mxu0 0
    %1621 = vmatpush.bf16.msra.mxu0 0
    %1622 = vmatpush.bf16.msra.mxu0 %v1613
    %1623 = vmatmul.bf16.gmra.mxu0 %v1610
    %v1624 = vpop.f32.mrf.mxu0
    %v1625 = vadd.f32 0.0, %v1624
    %v1626 = vpop.f32.mrf.mxu0
    %1627 = vdwg.mxu0
    %v1629 = vsel %vm1304, %v1503, 0
    %v1632 = vsel %vm1516, %v1511, 0
    %1634 = vmatpush.bf16.msra.mxu0 0
    %1635 = vmatpush.bf16.msra.mxu0 0
    %1636 = vmatpush.bf16.msra.mxu0 0
    %1637 = vmatpush.bf16.msra.mxu0 0
    %1638 = vmatpush.bf16.msra.mxu0 0
    %1639 = vmatpush.bf16.msra.mxu0 0
    %1640 = vmatpush.bf16.msra.mxu0 0
    %1641 = vmatpush.bf16.msra.mxu0 %v1632
    %1642 = vmatmul.bf16.gmra.mxu0 %v1629
    %v1643 = vpop.f32.mrf.mxu0
    %v1644 = vadd.f32 0.0, %v1643
    %v1645 = vpop.f32.mrf.mxu0
    %1646 = vdwg.mxu0
    %v1648 = vsel %vm1304, %v1504, 0
    %v1651 = vsel %vm1516, %v1512, 0
    %1653 = vmatpush.bf16.msra.mxu0 0
    %1654 = vmatpush.bf16.msra.mxu0 0
    %1655 = vmatpush.bf16.msra.mxu0 0
    %1656 = vmatpush.bf16.msra.mxu0 0
    %1657 = vmatpush.bf16.msra.mxu0 0
    %1658 = vmatpush.bf16.msra.mxu0 0
    %1659 = vmatpush.bf16.msra.mxu0 0
    %1660 = vmatpush.bf16.msra.mxu0 %v1651
    %1661 = vmatmul.bf16.gmra.mxu0 %v1648
    %v1662 = vpop.f32.mrf.mxu0
    %v1663 = vadd.f32 0.0, %v1662
    %v1664 = vpop.f32.mrf.mxu0
    %1665 = vdwg.mxu0
    %v1666 = vrot.slane %v1568, 4
    %v1667 = vsel %vm395, %v1666, %v1530
    %v1668 = vrot.slane %v1530, 4
    %v1669 = vsel %vm395, %v1568, %v1668
    %v1671 = vunpack.c.l.s4 1983009808
    %v1672 = vunpack.c.0.s8 %v1671
    %v1673 = vperm.slane %v1667, %v1672
    %v1675 = vunpack.c.l.s4 1983009808
    %v1676 = vunpack.c.0.s8 %v1675
    %v1677 = vperm.slane %v1669, %v1676
    %v1678 = vrot.slane %v1587, 4
    %v1679 = vsel %vm395, %v1678, %v1549
    %v1680 = vrot.slane %v1549, 4
    %v1681 = vsel %vm395, %v1587, %v1680
    %v1683 = vunpack.c.l.s4 1983009808
    %v1684 = vunpack.c.0.s8 %v1683
    %v1685 = vperm.slane %v1679, %v1684
    %v1687 = vunpack.c.l.s4 1983009808
    %v1688 = vunpack.c.0.s8 %v1687
    %v1689 = vperm.slane %v1681, %v1688
    %v1690 = vrot.slane %v1685, 4
    %v1691 = vsel %vm395, %v1690, %v1673
    %v1692 = vrot.slane %v1673, 4
    %v1693 = vsel %vm395, %v1685, %v1692
    %v1695 = vunpack.c.l.s4 1934713408
    %v1696 = vunpack.c.0.s8 %v1695
    %v1697 = vperm.slane %v1691, %v1696
    %v1699 = vunpack.c.l.s4 1934713408
    %v1700 = vunpack.c.0.s8 %v1699
    %v1701 = vperm.slane %v1693, %v1700
    %v1702 = vrot.slane %v1689, 4
    %v1703 = vsel %vm395, %v1702, %v1677
    %v1704 = vrot.slane %v1677, 4
    %v1705 = vsel %vm395, %v1689, %v1704
    %v1707 = vunpack.c.l.s4 1934713408
    %v1708 = vunpack.c.0.s8 %v1707
    %v1709 = vperm.slane %v1703, %v1708
    %v1711 = vunpack.c.l.s4 1934713408
    %v1712 = vunpack.c.0.s8 %v1711
    %v1713 = vperm.slane %v1705, %v1712
    %v1714 = vrot.slane %v1697, 4
    %v1715 = vsel %vm395, 0.0, %v1714
    %v1716 = vrot.slane %v1701, 4
    %v1717 = vsel %vm395, 0.0, %v1716
    %v1718 = vrot.slane %v1709, 4
    %v1719 = vsel %vm395, 0.0, %v1718
    %v1720 = vrot.slane %v1713, 4
    %v1721 = vsel %vm395, 0.0, %v1720
    %v1722 = vrot.slane %v1644, 4
    %v1723 = vsel %vm395, %v1722, %v1606
    %v1724 = vrot.slane %v1606, 4
    %v1725 = vsel %vm395, %v1644, %v1724
    %v1727 = vunpack.c.l.s4 1983009808
    %v1728 = vunpack.c.0.s8 %v1727
    %v1729 = vperm.slane %v1723, %v1728
    %v1731 = vunpack.c.l.s4 1983009808
    %v1732 = vunpack.c.0.s8 %v1731
    %v1733 = vperm.slane %v1725, %v1732
    %v1734 = vrot.slane %v1663, 4
    %v1735 = vsel %vm395, %v1734, %v1625
    %v1736 = vrot.slane %v1625, 4
    %v1737 = vsel %vm395, %v1663, %v1736
    %v1739 = vunpack.c.l.s4 1983009808
    %v1740 = vunpack.c.0.s8 %v1739
    %v1741 = vperm.slane %v1735, %v1740
    %v1743 = vunpack.c.l.s4 1983009808
    %v1744 = vunpack.c.0.s8 %v1743
    %v1745 = vperm.slane %v1737, %v1744
    %v1746 = vrot.slane %v1741, 4
    %v1747 = vsel %vm395, %v1746, %v1729
    %v1748 = vrot.slane %v1729, 4
    %v1749 = vsel %vm395, %v1741, %v1748
    %v1751 = vunpack.c.l.s4 1934713408
    %v1752 = vunpack.c.0.s8 %v1751
    %v1753 = vperm.slane %v1747, %v1752
    %v1755 = vunpack.c.l.s4 1934713408
    %v1756 = vunpack.c.0.s8 %v1755
    %v1757 = vperm.slane %v1749, %v1756
    %v1758 = vrot.slane %v1745, 4
    %v1759 = vsel %vm395, %v1758, %v1733
    %v1760 = vrot.slane %v1733, 4
    %v1761 = vsel %vm395, %v1745, %v1760
    %v1763 = vunpack.c.l.s4 1934713408
    %v1764 = vunpack.c.0.s8 %v1763
    %v1765 = vperm.slane %v1759, %v1764
    %v1767 = vunpack.c.l.s4 1934713408
    %v1768 = vunpack.c.0.s8 %v1767
    %v1769 = vperm.slane %v1761, %v1768
    %v1770 = vrot.slane %v1753, 4
    %v1771 = vsel %vm395, 0.0, %v1770
    %v1772 = vrot.slane %v1757, 4
    %v1773 = vsel %vm395, 0.0, %v1772
    %v1774 = vrot.slane %v1765, 4
    %v1775 = vsel %vm395, 0.0, %v1774
    %v1776 = vrot.slane %v1769, 4
    %v1777 = vsel %vm395, 0.0, %v1776
    %v1778 = vsel %vm395, %v1716, %v1697
    %v1780 = vunpack.c.l.s4 1983009808
    %v1781 = vunpack.c.0.s8 %v1780
    %v1782 = vperm.slane %v1778, %v1781
    %v1783 = vrot.slane %v1717, 4
    %v1784 = vsel %vm395, %v1783, %v1715
    %v1786 = vunpack.c.l.s4 1983009808
    %v1787 = vunpack.c.0.s8 %v1786
    %v1788 = vperm.slane %v1784, %v1787
    %v1789 = vsel %vm395, %v1720, %v1709
    %v1791 = vunpack.c.l.s4 1983009808
    %v1792 = vunpack.c.0.s8 %v1791
    %v1793 = vperm.slane %v1789, %v1792
    %v1794 = vrot.slane %v1721, 4
    %v1795 = vsel %vm395, %v1794, %v1719
    %v1797 = vunpack.c.l.s4 1983009808
    %v1798 = vunpack.c.0.s8 %v1797
    %v1799 = vperm.slane %v1795, %v1798
    %v1800 = vrot.slane %v1788, 4
    %v1801 = vsel %vm395, %v1800, %v1782
    %v1802 = vrot.slane %v1782, 4
    %v1803 = vsel %vm395, %v1788, %v1802
    %v1805 = vunpack.c.l.s4 1934713408
    %v1806 = vunpack.c.0.s8 %v1805
    %v1807 = vperm.slane %v1801, %v1806
    %v1809 = vunpack.c.l.s4 1934713408
    %v1810 = vunpack.c.0.s8 %v1809
    %v1811 = vperm.slane %v1803, %v1810
    %v1812 = vrot.slane %v1799, 4
    %v1813 = vsel %vm395, %v1812, %v1793
    %v1814 = vrot.slane %v1793, 4
    %v1815 = vsel %vm395, %v1799, %v1814
    %v1817 = vunpack.c.l.s4 1934713408
    %v1818 = vunpack.c.0.s8 %v1817
    %v1819 = vperm.slane %v1813, %v1818
    %v1821 = vunpack.c.l.s4 1934713408
    %v1822 = vunpack.c.0.s8 %v1821
    %v1823 = vperm.slane %v1815, %v1822
    %v1824 = vrot.slane %v1819, 4
    %v1825 = vsel %vm395, %v1824, %v1807
    %v1826 = vrot.slane %v1807, 4
    %v1827 = vsel %vm395, %v1819, %v1826
    %v1828 = vrot.slane %v1823, 4
    %v1829 = vsel %vm395, %v1828, %v1811
    %v1830 = vrot.slane %v1811, 4
    %v1831 = vsel %vm395, %v1823, %v1830
    %v1832 = vsel %vm395, %v1772, %v1753
    %v1834 = vunpack.c.l.s4 1983009808
    %v1835 = vunpack.c.0.s8 %v1834
    %v1836 = vperm.slane %v1832, %v1835
    %v1837 = vrot.slane %v1773, 4
    %v1838 = vsel %vm395, %v1837, %v1771
    %v1840 = vunpack.c.l.s4 1983009808
    %v1841 = vunpack.c.0.s8 %v1840
    %v1842 = vperm.slane %v1838, %v1841
    %v1843 = vsel %vm395, %v1776, %v1765
    %v1845 = vunpack.c.l.s4 1983009808
    %v1846 = vunpack.c.0.s8 %v1845
    %v1847 = vperm.slane %v1843, %v1846
    %v1848 = vrot.slane %v1777, 4
    %v1849 = vsel %vm395, %v1848, %v1775
    %v1851 = vunpack.c.l.s4 1983009808
    %v1852 = vunpack.c.0.s8 %v1851
    %v1853 = vperm.slane %v1849, %v1852
    %v1854 = vrot.slane %v1842, 4
    %v1855 = vsel %vm395, %v1854, %v1836
    %v1856 = vrot.slane %v1836, 4
    %v1857 = vsel %vm395, %v1842, %v1856
    %v1859 = vunpack.c.l.s4 1934713408
    %v1860 = vunpack.c.0.s8 %v1859
    %v1861 = vperm.slane %v1855, %v1860
    %v1863 = vunpack.c.l.s4 1934713408
    %v1864 = vunpack.c.0.s8 %v1863
    %v1865 = vperm.slane %v1857, %v1864
    %v1866 = vrot.slane %v1853, 4
    %v1867 = vsel %vm395, %v1866, %v1847
    %v1868 = vrot.slane %v1847, 4
    %v1869 = vsel %vm395, %v1853, %v1868
    %v1871 = vunpack.c.l.s4 1934713408
    %v1872 = vunpack.c.0.s8 %v1871
    %v1873 = vperm.slane %v1867, %v1872
    %v1875 = vunpack.c.l.s4 1934713408
    %v1876 = vunpack.c.0.s8 %v1875
    %v1877 = vperm.slane %v1869, %v1876
    %v1878 = vrot.slane %v1873, 4
    %v1879 = vsel %vm395, %v1878, %v1861
    %v1880 = vrot.slane %v1861, 4
    %v1881 = vsel %vm395, %v1873, %v1880
    %v1882 = vrot.slane %v1877, 4
    %v1883 = vsel %vm395, %v1882, %v1865
    %v1884 = vrot.slane %v1865, 4
    %v1885 = vsel %vm395, %v1877, %v1884
    %1888 = vrot.lane.b32.xlu0 %v1827, 32
    %v1889 = vpop.permute.xlu0 %1888
    %1890 = vrot.lane.b32.xlu0 %v1881, 32
    %v1891 = vpop.permute.xlu0 %1890
    %1896 = vrot.lane.b32.xlu0 %v1829, 64
    %v1897 = vpop.permute.xlu0 %1896
    %1898 = vrot.lane.b32.xlu0 %v1883, 64
    %v1899 = vpop.permute.xlu0 %1898
    %1904 = vrot.lane.b32.xlu0 %v1831, 96
    %v1905 = vpop.permute.xlu0 %1904
    %1906 = vrot.lane.b32.xlu0 %v1885, 96
    %v1907 = vpop.permute.xlu0 %1906
    %v1910 = vsel %vm1095, %v1825, %v1889
    %v1911 = vsel %vm1095, %v1879, %v1891
    %vm1912 = vcmask 523264
    %v1913 = vsel %vm1912, %v1910, %v1897
    %v1914 = vsel %vm1912, %v1911, %v1899
    %vm1915 = vcmask 785408
    %v1916 = vsel %vm1915, %v1913, %v1905
    %v1917 = vsel %vm1915, %v1914, %v1907
    %v1918 = vpack.c.bf16 %v1917, %v1916
    %v1919 = vld [vmem:[#allocation10] sm:$0xf]
    %v1920 = vld [vmem:[#allocation10 + $0x4] sm:$0xf]
    %v1921 = vld [vmem:[#allocation10 + $0x8] sm:$0xf]
    %v1922 = vld [vmem:[#allocation10 + $0xc] sm:$0xf]
    %v1923 = vld [vmem:[#allocation10 + $0x10] sm:$0xf]
    %v1924 = vld [vmem:[#allocation10 + $0x14] sm:$0xf]
    %v1925 = vld [vmem:[#allocation10 + $0x18] sm:$0xf]
    %v1926 = vld [vmem:[#allocation10 + $0x1c] sm:$0xf]
    %v1927 = vld [vmem:[#allocation10 + $0x20] sm:$0xf]
    %v1928 = vld [vmem:[#allocation10 + $0x24] sm:$0xf]
    %v1929 = vld [vmem:[#allocation10 + $0x28] sm:$0xf]
    %v1930 = vld [vmem:[#allocation10 + $0x2c] sm:$0xf]
    %v1931 = vld [vmem:[#allocation10 + $0x30] sm:$0xf]
    %v1932 = vld [vmem:[#allocation10 + $0x34] sm:$0xf]
    %v1933 = vld [vmem:[#allocation10 + $0x38] sm:$0xf]
    %v1934 = vld [vmem:[#allocation10 + $0x3c] sm:$0xf]
    %v1935 = vld [vmem:[%s6] sm:$0x1]
    %v1937 = vperm.slane %v1935, 0
    %v1955 = vunpack.c.l.b16 %v1919
    %v1956 = vunpack.c.l.b16 %v1920
    %v1957 = vunpack.c.l.b16 %v1921
    %v1958 = vunpack.c.l.b16 %v1922
    %v1959 = vunpack.c.l.b16 %v1923
    %v1960 = vunpack.c.l.b16 %v1924
    %v1961 = vunpack.c.l.b16 %v1925
    %v1962 = vunpack.c.l.b16 %v1926
    %v1963 = vunpack.c.l.b16 %v1927
    %v1964 = vunpack.c.l.b16 %v1928
    %v1965 = vunpack.c.l.b16 %v1929
    %v1966 = vunpack.c.l.b16 %v1930
    %v1967 = vunpack.c.l.b16 %v1931
    %v1968 = vunpack.c.l.b16 %v1932
    %v1969 = vunpack.c.l.b16 %v1933
    %v1970 = vunpack.c.l.b16 %v1934
    %v1971 = vpack.c.b16 %v1956, %v1955
    %v1972 = vpack.c.b16 %v1958, %v1957
    %v1973 = vpack.c.b16 %v1960, %v1959
    %v1974 = vpack.c.b16 %v1962, %v1961
    %v1975 = vpack.c.b16 %v1964, %v1963
    %v1976 = vpack.c.b16 %v1966, %v1965
    %v1977 = vpack.c.b16 %v1968, %v1967
    %v1978 = vpack.c.b16 %v1970, %v1969
    %1987 = vmatpush.bf16.msra.mxu0 %v1978
    %1988 = vmatpush.bf16.msra.mxu0 %v1977
    %1989 = vmatpush.bf16.msra.mxu0 %v1976
    %1990 = vmatpush.bf16.msra.mxu0 %v1975
    %1991 = vmatpush.bf16.msra.mxu0 %v1974
    %1992 = vmatpush.bf16.msra.mxu0 %v1973
    %1993 = vmatpush.bf16.msra.mxu0 %v1972
    %1994 = vmatpush.bf16.msra.mxu0 %v1971
    %1995 = vmatmul.bf16.gmra.mxu0 %v1918
    %v1996 = vpop.f32.mrf.mxu0
    %v1997 = vadd.f32 %v1937, %v1996
    %v1998 = vpop.f32.mrf.mxu0
    %v1999 = vadd.f32 %v1937, %v1998
    %2000 = vdwg.mxu0
    %v2001 = vadd.f32 %v1997, %v102
    %v2002 = vadd.f32 %v1999, %v103
    %2003 = vst [vmem:[#allocation11] sm:$0xff] %v2001
    %2004 = vst [vmem:[#allocation11 + $0x8] sm:$0xff] %v2002
    // Predicated region
    $region50: #{tpu_custom_call.1} parent=1 // pred_check
      _
    $region51: #{tpu_custom_call.1} parent=1 // pred_check_branch
      %2006 = sbr.rel (0) target = $region53
    $region52: #{tpu_custom_call.1} parent=1 // pred_region
      %2008 = vsyncadd [#allocation4], 0
      %s2009 = sshll.u32 [#allocation11], 4
      %s2010 = int_to_ptr.vmem [resolvable:$true] %s2009
      %s2011 = sshll.u32 %s7, 4
      %s2012 = int_to_ptr.hbm [resolvable:$true] %s2011
      %2017 = dma.vmem_to_hbm [thread:$0]  %s2010, 256, %s2012, [#allocation4], 128, 128, 8
    $region53: #{tpu_custom_call.1} parent=1 // pred_fallthru
      _
    // Predicated region
    $region54: #{tpu_custom_call.1} parent=1 // pred_check
      _
    $region55: #{tpu_custom_call.1} parent=1 // pred_check_branch
      %2019 = sbr.rel (0) target = $region57
    $region56: #{tpu_custom_call.1} parent=1 // pred_region
      %2021 = dma.done [#allocation4], 256
    $region57: #{tpu_custom_call.1} parent=1 // pred_fallthru
      _
    %2022 = vsyncpa [#allocation3], 1
    %2023 = vsyncpa [#allocation6], 1
    %2024 = vsyncpa [#allocation9], 1
    %2025 = vsyncpa [#allocation4], 1

</llo_original>
